<compile_context>
chip_gen: v5e
topology: v5e:2x2
jax: 0.10.0
libtpu: 0.0.40
codegen_flags: <defaults>
</compile_context>

<pallas_src>
import functools

import numpy as np
import jax
import jax.numpy as jnp
from jax.experimental import pallas as pl
from jax.experimental.pallas import tpu as pltpu

EPS = 1e-5


# ---------------------------------------------------------------------------
# Wrapper-side weight / constant construction (layout plumbing, plain XLA)
# ---------------------------------------------------------------------------

def _band_weight(dw_row, pw, W):
    """Fused (depthwise-row x pointwise) banded weight in lane-folded layout.

    M[(w_in*Cin + ci), (w_out*Cout + co)] = dw_row[(w_in - w_out) + 1, ci] * pw[ci, co]
    for |w_in - w_out| <= 1, else 0.  Missing band entries == zero padding in W.
    dw_row: (3, Cin), pw: (Cin, Cout)  ->  (W*Cin, W*Cout)
    """
    Cin, Cout = pw.shape
    w_in = jnp.arange(W)[:, None]
    w_out = jnp.arange(W)[None, :]
    M = jnp.zeros((W, Cin, W, Cout), pw.dtype)
    for dx in (-1, 0, 1):
        mask = (w_in - w_out == dx).astype(pw.dtype)            # (W, W)
        k = dw_row[dx + 1][:, None] * pw                        # (Cin, Cout)
        M = M + mask[:, None, :, None] * k[None, :, None, :]
    return M.reshape(W * Cin, W * Cout)


def _skip_weight(wskip, W, Wout):
    """Stride-2 1x1 conv folded over W: picks w = 2*wo and mixes channels."""
    Cin, Cout = wskip.shape
    sel = (jnp.arange(W)[:, None] == 2 * jnp.arange(Wout)[None, :]).astype(wskip.dtype)
    M = sel[:, None, :, None] * wskip[None, :, None, :]
    return M.reshape(W * Cin, Wout * Cout)


def _shift_mat(N, H, dy):
    """(N*H, N*H): (S @ X)[n*H+h] = X[n*H+h+dy], zero outside each image."""
    M = np.zeros((N * H, N * H), np.float32)
    for n in range(N):
        for h in range(H):
            hs = h + dy
            if 0 <= hs < H:
                M[n * H + h, n * H + hs] = 1.0
    return M


def _sel_w(W, Wout, C, dx):
    """(W*C, Wout*C) lane-selection for maxpool: picks w = 2*wo+dx, clipped to
    the always-valid window center 2*wo at the borders (so no -inf pad)."""
    M = np.zeros((W * C, Wout * C), np.float32)
    for wo in range(Wout):
        w = 2 * wo + dx
        if not (0 <= w < W):
            w = 2 * wo
        for c in range(C):
            M[w * C + c, wo * C + c] = 1.0
    return M


def _dec_h(N, H, Hout, dy):
    """(N*Hout, N*H) row-selection: picks h = 2*ho+dy per image, clipped to 2*ho."""
    M = np.zeros((N * Hout, N * H), np.float32)
    for n in range(N):
        for ho in range(Hout):
            h = 2 * ho + dy
            if not (0 <= h < H):
                h = 2 * ho
            M[n * Hout + ho, n * H + h] = 1.0
    return M


def _chan_sum_mat(groups, C):
    """kron(ones, eye): per-channel reduce over the w lane-groups AND broadcast
    back across them in a single matmul."""
    return np.kron(np.ones((groups, groups), np.float32), np.eye(C, dtype=np.float32))


# ---------------------------------------------------------------------------
# Kernel: whole block fused, one store, no scratch refs
# ---------------------------------------------------------------------------

def _block_kernel(x_ref, wb1_ref, wb2_ref, wskip_ref, sshift_ref, selw_ref,
                  dech_ref, pcr_ref, pcs_ref, bnr_ref, bns_ref, o_ref,
                  *, count_rep, count_skip):

    def mm(a, b):
        return jnp.dot(a, b, preferred_element_type=jnp.float32)

    def bn(y, gamma_l, beta_l, pc, count):
        # training-mode BatchNorm on a lane-folded (rows, w*C) view.
        # `pc` reduces per channel over the w lane-groups and broadcasts back;
        # gamma/beta arrive pre-tiled to lane width.  Variance clamped >= 0.
        inv = 1.0 / count
        s = jnp.sum(y, axis=0, keepdims=True)
        ss = jnp.sum(y * y, axis=0, keepdims=True)
        mean = mm(s, pc) * inv
        var = jnp.maximum(mm(ss, pc) * inv - mean * mean, 0.0)
        scale = gamma_l * jax.lax.rsqrt(var + EPS)
        shift = beta_l - mean * scale
        return y * scale + shift

    x2 = x_ref[...]            # (N*H, W*Cin)       lane-folded NHWC input
    wb1 = wb1_ref[...]         # (3, W*Cin, W*Cout)  fused sepconv1 band weights
    wb2 = wb2_ref[...]         # (3, W*Cout, W*Cout) fused sepconv2 band weights
    sshift = sshift_ref[...]   # (2, N*H, N*H)       row shifts dy = -1, +1
    selw = selw_ref[...]       # (3, W*Cout, Wout*Cout)
    dech = dech_ref[...]       # (3, N*Hout, N*H)
    pcr = pcr_ref[...]         # (W*Cout, W*Cout)
    pcs = pcs_ref[...]         # (Wout*Cout, Wout*Cout)
    bnr = bnr_ref[...]         # (4, W*Cout)    [g1, b1, g2, b2] lane-tiled
    bns = bns_ref[...]         # (2, Wout*Cout) [gs, bs]        lane-tiled

    s_dn, s_up = sshift[0], sshift[1]

    # ---------------- rep branch ----------------
    a = jnp.maximum(x2, 0.0)                       # leading ReLU
    a_dn = mm(s_dn, a)                             # a[h-1] (zero halo baked in)
    a_up = mm(s_up, a)                             # a[h+1]
    # SeparableConv #1 (dw3x3 + pw1x1 fused), lane-folded banded matmuls
    y1 = mm(a, wb1[1]) + mm(a_dn, wb1[0]) + mm(a_up, wb1[2])     # (N*H, W*Cout)
    r1 = jnp.maximum(bn(y1, bnr[0:1], bnr[1:2], pcr, count_rep), 0.0)

    # SeparableConv #2
    r1_dn = mm(s_dn, r1)
    r1_up = mm(s_up, r1)
    y2 = mm(r1, wb2[1]) + mm(r1_dn, wb2[0]) + mm(r1_up, wb2[2])
    z = bn(y2, bnr[2:3], bnr[3:4], pcr, count_rep)               # (N*H, W*Cout)

    # MaxPool 3x3, stride 2, pad 1: selection matmuls, vectorized max.
    wpool = jnp.maximum(jnp.maximum(mm(z, selw[0]), mm(z, selw[1])),
                        mm(z, selw[2]))                          # (N*H, Wout*Cout)
    pooled = jnp.maximum(jnp.maximum(mm(dech[0], wpool), mm(dech[1], wpool)),
                         mm(dech[2], wpool))                     # (N*Hout, Wout*Cout)

    # ---------------- skip branch ----------------
    x_rows = mm(dech[1], x2)                       # rows h = 2*ho  (N*Hout, W*Cin)
    sk = mm(x_rows, wskip_ref[...])                # stride-2 1x1 conv, folded
    skip = bn(sk, bns[0:1], bns[1:2], pcs, count_skip)

    # ---------------- residual add: single lane-dense store ----------------
    o_ref[...] = pooled + skip


# ---------------------------------------------------------------------------
# Wrapper (public API keeps the PyTorch NCHW layout)
# ---------------------------------------------------------------------------

def block_forward(x_nchw, p):
    N, Cin, H, W = x_nchw.shape
    Cout = p["pw1"].shape[1]
    Hout, Wout = H // 2, W // 2

    # NCHW -> lane-folded NHWC: row = n*H + h, lane = w*Cin + ci
    x2 = jnp.transpose(x_nchw, (0, 2, 3, 1)).astype(jnp.float32).reshape(N * H, W * Cin)

    dw1 = p["dw1"].reshape(3, 3, Cin)
    dw2 = p["dw2"].reshape(3, 3, Cout)
    wb1 = jnp.stack([_band_weight(dw1[ky], p["pw1"], W) for ky in range(3)])
    wb2 = jnp.stack([_band_weight(dw2[ky], p["pw2"], W) for ky in range(3)])
    wskip = _skip_weight(p["wskip"], W, Wout)

    # structural 0/1 matrices (parameter independent)
    sshift = jnp.asarray(np.stack([_shift_mat(N, H, -1), _shift_mat(N, H, +1)]))
    selw = jnp.asarray(np.stack([_sel_w(W, Wout, Cout, dx) for dx in (-1, 0, 1)]))
    dech = jnp.asarray(np.stack([_dec_h(N, H, Hout, dy) for dy in (-1, 0, 1)]))
    pcr = jnp.asarray(_chan_sum_mat(W, Cout))
    pcs = jnp.asarray(_chan_sum_mat(Wout, Cout))

    # BN affine params pre-tiled to lane width in the wrapper
    bnr = jnp.concatenate([jnp.tile(p["g1"], (1, W)), jnp.tile(p["b1"], (1, W)),
                           jnp.tile(p["g2"], (1, W)), jnp.tile(p["b2"], (1, W))],
                          axis=0)                                  # (4, W*Cout)
    bns = jnp.concatenate([jnp.tile(p["gs"], (1, Wout)),
                           jnp.tile(p["bs"], (1, Wout))], axis=0)  # (2, Wout*Cout)

    kernel = functools.partial(_block_kernel,
                               count_rep=float(N * H * W),
                               count_skip=float(N * Hout * Wout))

    y2d = pl.pallas_call(
        kernel,
        out_shape=jax.ShapeDtypeStruct((N * Hout, Wout * Cout), jnp.float32),
        compiler_params=pltpu.CompilerParams(vmem_limit_bytes=32 * 1024 * 1024),
    )(x2, wb1, wb2, wskip, sshift, selw, dech, pcr, pcs, bnr, bns)

    # layout plumbing only: (N*Hout, Wout*Cout) -> NCHW
    return jnp.transpose(y2d.reshape(N, Hout, Wout, Cout), (0, 3, 1, 2))


def init_params(key, in_f=4, out_f=8):
    ks = jax.random.split(key, 10)
    return {
        # SeparableConv2d #1: depthwise (9, Cin)   [PyTorch (Cin,1,3,3)],
        #                     pointwise (Cin, Cout) [PyTorch (Cout,Cin,1,1)]
        "dw1": 0.1 * jax.random.normal(ks[0], (9, in_f), jnp.float32),
        "pw1": 0.1 * jax.random.normal(ks[1], (in_f, out_f), jnp.float32),
        "g1": 1.0 + 0.05 * jax.random.normal(ks[2], (1, out_f), jnp.float32),
        "b1": 0.05 * jax.random.normal(ks[3], (1, out_f), jnp.float32),
        # SeparableConv2d #2
        "dw2": 0.1 * jax.random.normal(ks[4], (9, out_f), jnp.float32),
        "pw2": 0.1 * jax.random.normal(ks[5], (out_f, out_f), jnp.float32),
        "g2": 1.0 + 0.05 * jax.random.normal(ks[6], (1, out_f), jnp.float32),
        "b2": 0.05 * jax.random.normal(ks[7], (1, out_f), jnp.float32),
        # skip 1x1 conv (stride 2) + BN
        "wskip": 0.1 * jax.random.normal(ks[8], (in_f, out_f), jnp.float32),
        "gs": jnp.ones((1, out_f), jnp.float32),
        "bs": 0.05 * jax.random.normal(ks[9], (1, out_f), jnp.float32),
    }


if __name__ == "__main__":
    key = jax.random.PRNGKey(0)
    kx, kp = jax.random.split(key)
    # NCHW input, consistent with the PyTorch module API
    x = jax.random.normal(kx, (2, 4, 16, 16), jnp.float32)
    params = init_params(kp, in_f=4, out_f=8)

    y = jax.jit(block_forward)(x, params)
    jax.block_until_ready(y)
    assert y.shape == (2, 8, 8, 8), y.shape
    assert bool(jnp.all(jnp.isfinite(y)))
    print("KERNEL_OK")
</pallas_src>

<mosaic_0001>
module attributes {stable_mosaic.version = 11 : i64} {
  func.func @_block_kernel(%arg0: memref<32x64xf32, #tpu.memory_space<vmem>>, %arg1: memref<3x64x128xf32, #tpu.memory_space<vmem>>, %arg2: memref<3x128x128xf32, #tpu.memory_space<vmem>>, %arg3: memref<64x64xf32, #tpu.memory_space<vmem>>, %arg4: memref<2x32x32xf32, #tpu.memory_space<vmem>>, %arg5: memref<3x128x64xf32, #tpu.memory_space<vmem>>, %arg6: memref<3x16x32xf32, #tpu.memory_space<vmem>>, %arg7: memref<128x128xf32, #tpu.memory_space<vmem>>, %arg8: memref<64x64xf32, #tpu.memory_space<vmem>>, %arg9: memref<4x128xf32, #tpu.memory_space<vmem>>, %arg10: memref<2x64xf32, #tpu.memory_space<vmem>>, %arg11: memref<16x64xf32, #tpu.memory_space<vmem>>) attributes {dimension_semantics = [], scalar_prefetch = 0 : i64, scratch_operands = 0 : i64, tpu.core_type = #tpu.core_type<tc>} {
    %c0 = arith.constant 0 : index
    %c0_0 = arith.constant 0 : index
    %0 = vector.load %arg0[%c0, %c0_0] : memref<32x64xf32, #tpu.memory_space<vmem>>, vector<32x64xf32>
    %c0_1 = arith.constant 0 : index
    %c0_2 = arith.constant 0 : index
    %c0_3 = arith.constant 0 : index
    %1 = vector.load %arg1[%c0_1, %c0_2, %c0_3] : memref<3x64x128xf32, #tpu.memory_space<vmem>>, vector<3x64x128xf32>
    %c0_4 = arith.constant 0 : index
    %c0_5 = arith.constant 0 : index
    %c0_6 = arith.constant 0 : index
    %2 = vector.load %arg2[%c0_4, %c0_5, %c0_6] : memref<3x128x128xf32, #tpu.memory_space<vmem>>, vector<3x128x128xf32>
    %c0_7 = arith.constant 0 : index
    %c0_8 = arith.constant 0 : index
    %c0_9 = arith.constant 0 : index
    %3 = vector.load %arg4[%c0_7, %c0_8, %c0_9] : memref<2x32x32xf32, #tpu.memory_space<vmem>>, vector<2x32x32xf32>
    %c0_10 = arith.constant 0 : index
    %c0_11 = arith.constant 0 : index
    %c0_12 = arith.constant 0 : index
    %4 = vector.load %arg5[%c0_10, %c0_11, %c0_12] : memref<3x128x64xf32, #tpu.memory_space<vmem>>, vector<3x128x64xf32>
    %c0_13 = arith.constant 0 : index
    %c0_14 = arith.constant 0 : index
    %c0_15 = arith.constant 0 : index
    %5 = vector.load %arg6[%c0_13, %c0_14, %c0_15] : memref<3x16x32xf32, #tpu.memory_space<vmem>>, vector<3x16x32xf32>
    %c0_16 = arith.constant 0 : index
    %c0_17 = arith.constant 0 : index
    %6 = vector.load %arg7[%c0_16, %c0_17] : memref<128x128xf32, #tpu.memory_space<vmem>>, vector<128x128xf32>
    %c0_18 = arith.constant 0 : index
    %c0_19 = arith.constant 0 : index
    %7 = vector.load %arg8[%c0_18, %c0_19] : memref<64x64xf32, #tpu.memory_space<vmem>>, vector<64x64xf32>
    %c0_20 = arith.constant 0 : index
    %c0_21 = arith.constant 0 : index
    %8 = vector.load %arg9[%c0_20, %c0_21] : memref<4x128xf32, #tpu.memory_space<vmem>>, vector<4x128xf32>
    %c0_22 = arith.constant 0 : index
    %c0_23 = arith.constant 0 : index
    %9 = vector.load %arg10[%c0_22, %c0_23] : memref<2x64xf32, #tpu.memory_space<vmem>>, vector<2x64xf32>
    %10 = vector.extract_strided_slice %3 {offsets = [0, 0, 0], sizes = [1, 32, 32], strides = [1, 1, 1]} : vector<2x32x32xf32> to vector<1x32x32xf32>
    %11 = vector.shape_cast %10 : vector<1x32x32xf32> to vector<32x32xf32>
    %12 = vector.extract_strided_slice %3 {offsets = [1, 0, 0], sizes = [1, 32, 32], strides = [1, 1, 1]} : vector<2x32x32xf32> to vector<1x32x32xf32>
    %13 = vector.shape_cast %12 : vector<1x32x32xf32> to vector<32x32xf32>
    %cst = arith.constant 0.000000e+00 : f32
    %14 = vector.broadcast %cst : f32 to vector<32x64xf32>
    %15 = arith.maximumf %0, %14 : vector<32x64xf32>
    %cst_24 = arith.constant dense<0.000000e+00> : vector<32x64xf32>
    %16 = tpu.matmul %11, %15, %cst_24 {dimension_numbers = #tpu.dot_dimension_numbers<[1], [0], [0], [1], [0, 0, 1, 1], [], []>} : vector<32x32xf32>, vector<32x64xf32>, vector<32x64xf32> -> vector<32x64xf32>
    %cst_25 = arith.constant dense<0.000000e+00> : vector<32x64xf32>
    %17 = tpu.matmul %13, %15, %cst_25 {dimension_numbers = #tpu.dot_dimension_numbers<[1], [0], [0], [1], [0, 0, 1, 1], [], []>} : vector<32x32xf32>, vector<32x64xf32>, vector<32x64xf32> -> vector<32x64xf32>
    %18 = vector.extract_strided_slice %1 {offsets = [1, 0, 0], sizes = [1, 64, 128], strides = [1, 1, 1]} : vector<3x64x128xf32> to vector<1x64x128xf32>
    %19 = vector.shape_cast %18 : vector<1x64x128xf32> to vector<64x128xf32>
    %cst_26 = arith.constant dense<0.000000e+00> : vector<32x128xf32>
    %20 = tpu.matmul %15, %19, %cst_26 {dimension_numbers = #tpu.dot_dimension_numbers<[1], [0], [0], [1], [0, 0, 1, 1], [], []>} : vector<32x64xf32>, vector<64x128xf32>, vector<32x128xf32> -> vector<32x128xf32>
    %21 = vector.extract_strided_slice %1 {offsets = [0, 0, 0], sizes = [1, 64, 128], strides = [1, 1, 1]} : vector<3x64x128xf32> to vector<1x64x128xf32>
    %22 = vector.shape_cast %21 : vector<1x64x128xf32> to vector<64x128xf32>
    %cst_27 = arith.constant dense<0.000000e+00> : vector<32x128xf32>
    %23 = tpu.matmul %16, %22, %cst_27 {dimension_numbers = #tpu.dot_dimension_numbers<[1], [0], [0], [1], [0, 0, 1, 1], [], []>} : vector<32x64xf32>, vector<64x128xf32>, vector<32x128xf32> -> vector<32x128xf32>
    %24 = arith.addf %20, %23 : vector<32x128xf32>
    %25 = vector.extract_strided_slice %1 {offsets = [2, 0, 0], sizes = [1, 64, 128], strides = [1, 1, 1]} : vector<3x64x128xf32> to vector<1x64x128xf32>
    %26 = vector.shape_cast %25 : vector<1x64x128xf32> to vector<64x128xf32>
    %cst_28 = arith.constant dense<0.000000e+00> : vector<32x128xf32>
    %27 = tpu.matmul %17, %26, %cst_28 {dimension_numbers = #tpu.dot_dimension_numbers<[1], [0], [0], [1], [0, 0, 1, 1], [], []>} : vector<32x64xf32>, vector<64x128xf32>, vector<32x128xf32> -> vector<32x128xf32>
    %28 = arith.addf %24, %27 : vector<32x128xf32>
    %29 = vector.extract_strided_slice %8 {offsets = [0, 0], sizes = [1, 128], strides = [1, 1]} : vector<4x128xf32> to vector<1x128xf32>
    %30 = vector.extract_strided_slice %8 {offsets = [1, 0], sizes = [1, 128], strides = [1, 1]} : vector<4x128xf32> to vector<1x128xf32>
    %cst_29 = arith.constant dense<0.000000e+00> : vector<128xf32>
    %31 = vector.multi_reduction <add>, %28, %cst_29 [0] : vector<32x128xf32> to vector<128xf32>
    %32 = vector.shape_cast %31 : vector<128xf32> to vector<1x128xf32>
    %33 = arith.mulf %28, %28 : vector<32x128xf32>
    %cst_30 = arith.constant dense<0.000000e+00> : vector<128xf32>
    %34 = vector.multi_reduction <add>, %33, %cst_30 [0] : vector<32x128xf32> to vector<128xf32>
    %35 = vector.shape_cast %34 : vector<128xf32> to vector<1x128xf32>
    %cst_31 = arith.constant dense<0.000000e+00> : vector<1x128xf32>
    %36 = tpu.matmul %32, %6, %cst_31 {dimension_numbers = #tpu.dot_dimension_numbers<[1], [0], [0], [1], [0, 0, 1, 1], [], []>} : vector<1x128xf32>, vector<128x128xf32>, vector<1x128xf32> -> vector<1x128xf32>
    %cst_32 = arith.constant 0.001953125 : f32
    %37 = vector.broadcast %cst_32 : f32 to vector<1x128xf32>
    %38 = arith.mulf %36, %37 : vector<1x128xf32>
    %cst_33 = arith.constant dense<0.000000e+00> : vector<1x128xf32>
    %39 = tpu.matmul %35, %6, %cst_33 {dimension_numbers = #tpu.dot_dimension_numbers<[1], [0], [0], [1], [0, 0, 1, 1], [], []>} : vector<1x128xf32>, vector<128x128xf32>, vector<1x128xf32> -> vector<1x128xf32>
    %cst_34 = arith.constant 0.001953125 : f32
    %40 = vector.broadcast %cst_34 : f32 to vector<1x128xf32>
    %41 = arith.mulf %39, %40 : vector<1x128xf32>
    %42 = arith.mulf %38, %38 : vector<1x128xf32>
    %43 = arith.subf %41, %42 : vector<1x128xf32>
    %cst_35 = arith.constant 0.000000e+00 : f32
    %44 = vector.broadcast %cst_35 : f32 to vector<1x128xf32>
    %45 = arith.maximumf %43, %44 : vector<1x128xf32>
    %cst_36 = arith.constant 9.99999974E-6 : f32
    %46 = vector.broadcast %cst_36 : f32 to vector<1x128xf32>
    %47 = arith.addf %45, %46 : vector<1x128xf32>
    %48 = math.rsqrt %47 : vector<1x128xf32>
    %49 = arith.mulf %29, %48 : vector<1x128xf32>
    %50 = arith.mulf %38, %49 : vector<1x128xf32>
    %51 = arith.subf %30, %50 : vector<1x128xf32>
    %52 = vector.broadcast %49 : vector<1x128xf32> to vector<32x128xf32>
    %53 = arith.mulf %28, %52 : vector<32x128xf32>
    %54 = vector.broadcast %51 : vector<1x128xf32> to vector<32x128xf32>
    %55 = arith.addf %53, %54 : vector<32x128xf32>
    %cst_37 = arith.constant 0.000000e+00 : f32
    %56 = vector.broadcast %cst_37 : f32 to vector<32x128xf32>
    %57 = arith.maximumf %55, %56 : vector<32x128xf32>
    %cst_38 = arith.constant dense<0.000000e+00> : vector<32x128xf32>
    %58 = tpu.matmul %11, %57, %cst_38 {dimension_numbers = #tpu.dot_dimension_numbers<[1], [0], [0], [1], [0, 0, 1, 1], [], []>} : vector<32x32xf32>, vector<32x128xf32>, vector<32x128xf32> -> vector<32x128xf32>
    %cst_39 = arith.constant dense<0.000000e+00> : vector<32x128xf32>
    %59 = tpu.matmul %13, %57, %cst_39 {dimension_numbers = #tpu.dot_dimension_numbers<[1], [0], [0], [1], [0, 0, 1, 1], [], []>} : vector<32x32xf32>, vector<32x128xf32>, vector<32x128xf32> -> vector<32x128xf32>
    %60 = vector.extract_strided_slice %2 {offsets = [1, 0, 0], sizes = [1, 128, 128], strides = [1, 1, 1]} : vector<3x128x128xf32> to vector<1x128x128xf32>
    %61 = vector.shape_cast %60 : vector<1x128x128xf32> to vector<128x128xf32>
    %cst_40 = arith.constant dense<0.000000e+00> : vector<32x128xf32>
    %62 = tpu.matmul %57, %61, %cst_40 {dimension_numbers = #tpu.dot_dimension_numbers<[1], [0], [0], [1], [0, 0, 1, 1], [], []>} : vector<32x128xf32>, vector<128x128xf32>, vector<32x128xf32> -> vector<32x128xf32>
    %63 = vector.extract_strided_slice %2 {offsets = [0, 0, 0], sizes = [1, 128, 128], strides = [1, 1, 1]} : vector<3x128x128xf32> to vector<1x128x128xf32>
    %64 = vector.shape_cast %63 : vector<1x128x128xf32> to vector<128x128xf32>
    %cst_41 = arith.constant dense<0.000000e+00> : vector<32x128xf32>
    %65 = tpu.matmul %58, %64, %cst_41 {dimension_numbers = #tpu.dot_dimension_numbers<[1], [0], [0], [1], [0, 0, 1, 1], [], []>} : vector<32x128xf32>, vector<128x128xf32>, vector<32x128xf32> -> vector<32x128xf32>
    %66 = arith.addf %62, %65 : vector<32x128xf32>
    %67 = vector.extract_strided_slice %2 {offsets = [2, 0, 0], sizes = [1, 128, 128], strides = [1, 1, 1]} : vector<3x128x128xf32> to vector<1x128x128xf32>
    %68 = vector.shape_cast %67 : vector<1x128x128xf32> to vector<128x128xf32>
    %cst_42 = arith.constant dense<0.000000e+00> : vector<32x128xf32>
    %69 = tpu.matmul %59, %68, %cst_42 {dimension_numbers = #tpu.dot_dimension_numbers<[1], [0], [0], [1], [0, 0, 1, 1], [], []>} : vector<32x128xf32>, vector<128x128xf32>, vector<32x128xf32> -> vector<32x128xf32>
    %70 = arith.addf %66, %69 : vector<32x128xf32>
    %71 = vector.extract_strided_slice %8 {offsets = [2, 0], sizes = [1, 128], strides = [1, 1]} : vector<4x128xf32> to vector<1x128xf32>
    %72 = vector.extract_strided_slice %8 {offsets = [3, 0], sizes = [1, 128], strides = [1, 1]} : vector<4x128xf32> to vector<1x128xf32>
    %cst_43 = arith.constant dense<0.000000e+00> : vector<128xf32>
    %73 = vector.multi_reduction <add>, %70, %cst_43 [0] : vector<32x128xf32> to vector<128xf32>
    %74 = vector.shape_cast %73 : vector<128xf32> to vector<1x128xf32>
    %75 = arith.mulf %70, %70 : vector<32x128xf32>
    %cst_44 = arith.constant dense<0.000000e+00> : vector<128xf32>
    %76 = vector.multi_reduction <add>, %75, %cst_44 [0] : vector<32x128xf32> to vector<128xf32>
    %77 = vector.shape_cast %76 : vector<128xf32> to vector<1x128xf32>
    %cst_45 = arith.constant dense<0.000000e+00> : vector<1x128xf32>
    %78 = tpu.matmul %74, %6, %cst_45 {dimension_numbers = #tpu.dot_dimension_numbers<[1], [0], [0], [1], [0, 0, 1, 1], [], []>} : vector<1x128xf32>, vector<128x128xf32>, vector<1x128xf32> -> vector<1x128xf32>
    %cst_46 = arith.constant 0.001953125 : f32
    %79 = vector.broadcast %cst_46 : f32 to vector<1x128xf32>
    %80 = arith.mulf %78, %79 : vector<1x128xf32>
    %cst_47 = arith.constant dense<0.000000e+00> : vector<1x128xf32>
    %81 = tpu.matmul %77, %6, %cst_47 {dimension_numbers = #tpu.dot_dimension_numbers<[1], [0], [0], [1], [0, 0, 1, 1], [], []>} : vector<1x128xf32>, vector<128x128xf32>, vector<1x128xf32> -> vector<1x128xf32>
    %cst_48 = arith.constant 0.001953125 : f32
    %82 = vector.broadcast %cst_48 : f32 to vector<1x128xf32>
    %83 = arith.mulf %81, %82 : vector<1x128xf32>
    %84 = arith.mulf %80, %80 : vector<1x128xf32>
    %85 = arith.subf %83, %84 : vector<1x128xf32>
    %cst_49 = arith.constant 0.000000e+00 : f32
    %86 = vector.broadcast %cst_49 : f32 to vector<1x128xf32>
    %87 = arith.maximumf %85, %86 : vector<1x128xf32>
    %cst_50 = arith.constant 9.99999974E-6 : f32
    %88 = vector.broadcast %cst_50 : f32 to vector<1x128xf32>
    %89 = arith.addf %87, %88 : vector<1x128xf32>
    %90 = math.rsqrt %89 : vector<1x128xf32>
    %91 = arith.mulf %71, %90 : vector<1x128xf32>
    %92 = arith.mulf %80, %91 : vector<1x128xf32>
    %93 = arith.subf %72, %92 : vector<1x128xf32>
    %94 = vector.broadcast %91 : vector<1x128xf32> to vector<32x128xf32>
    %95 = arith.mulf %70, %94 : vector<32x128xf32>
    %96 = vector.broadcast %93 : vector<1x128xf32> to vector<32x128xf32>
    %97 = arith.addf %95, %96 : vector<32x128xf32>
    %98 = vector.extract_strided_slice %4 {offsets = [0, 0, 0], sizes = [1, 128, 64], strides = [1, 1, 1]} : vector<3x128x64xf32> to vector<1x128x64xf32>
    %99 = vector.shape_cast %98 : vector<1x128x64xf32> to vector<128x64xf32>
    %cst_51 = arith.constant dense<0.000000e+00> : vector<32x64xf32>
    %100 = tpu.matmul %97, %99, %cst_51 {dimension_numbers = #tpu.dot_dimension_numbers<[1], [0], [0], [1], [0, 0, 1, 1], [], []>} : vector<32x128xf32>, vector<128x64xf32>, vector<32x64xf32> -> vector<32x64xf32>
    %101 = vector.extract_strided_slice %4 {offsets = [1, 0, 0], sizes = [1, 128, 64], strides = [1, 1, 1]} : vector<3x128x64xf32> to vector<1x128x64xf32>
    %102 = vector.shape_cast %101 : vector<1x128x64xf32> to vector<128x64xf32>
    %cst_52 = arith.constant dense<0.000000e+00> : vector<32x64xf32>
    %103 = tpu.matmul %97, %102, %cst_52 {dimension_numbers = #tpu.dot_dimension_numbers<[1], [0], [0], [1], [0, 0, 1, 1], [], []>} : vector<32x128xf32>, vector<128x64xf32>, vector<32x64xf32> -> vector<32x64xf32>
    %104 = arith.maximumf %100, %103 : vector<32x64xf32>
    %105 = vector.extract_strided_slice %4 {offsets = [2, 0, 0], sizes = [1, 128, 64], strides = [1, 1, 1]} : vector<3x128x64xf32> to vector<1x128x64xf32>
    %106 = vector.shape_cast %105 : vector<1x128x64xf32> to vector<128x64xf32>
    %cst_53 = arith.constant dense<0.000000e+00> : vector<32x64xf32>
    %107 = tpu.matmul %97, %106, %cst_53 {dimension_numbers = #tpu.dot_dimension_numbers<[1], [0], [0], [1], [0, 0, 1, 1], [], []>} : vector<32x128xf32>, vector<128x64xf32>, vector<32x64xf32> -> vector<32x64xf32>
    %108 = arith.maximumf %104, %107 : vector<32x64xf32>
    %109 = vector.extract_strided_slice %5 {offsets = [0, 0, 0], sizes = [1, 16, 32], strides = [1, 1, 1]} : vector<3x16x32xf32> to vector<1x16x32xf32>
    %110 = vector.shape_cast %109 : vector<1x16x32xf32> to vector<16x32xf32>
    %cst_54 = arith.constant dense<0.000000e+00> : vector<16x64xf32>
    %111 = tpu.matmul %110, %108, %cst_54 {dimension_numbers = #tpu.dot_dimension_numbers<[1], [0], [0], [1], [0, 0, 1, 1], [], []>} : vector<16x32xf32>, vector<32x64xf32>, vector<16x64xf32> -> vector<16x64xf32>
    %112 = vector.extract_strided_slice %5 {offsets = [1, 0, 0], sizes = [1, 16, 32], strides = [1, 1, 1]} : vector<3x16x32xf32> to vector<1x16x32xf32>
    %113 = vector.shape_cast %112 : vector<1x16x32xf32> to vector<16x32xf32>
    %cst_55 = arith.constant dense<0.000000e+00> : vector<16x64xf32>
    %114 = tpu.matmul %113, %108, %cst_55 {dimension_numbers = #tpu.dot_dimension_numbers<[1], [0], [0], [1], [0, 0, 1, 1], [], []>} : vector<16x32xf32>, vector<32x64xf32>, vector<16x64xf32> -> vector<16x64xf32>
    %115 = arith.maximumf %111, %114 : vector<16x64xf32>
    %116 = vector.extract_strided_slice %5 {offsets = [2, 0, 0], sizes = [1, 16, 32], strides = [1, 1, 1]} : vector<3x16x32xf32> to vector<1x16x32xf32>
    %117 = vector.shape_cast %116 : vector<1x16x32xf32> to vector<16x32xf32>
    %cst_56 = arith.constant dense<0.000000e+00> : vector<16x64xf32>
    %118 = tpu.matmul %117, %108, %cst_56 {dimension_numbers = #tpu.dot_dimension_numbers<[1], [0], [0], [1], [0, 0, 1, 1], [], []>} : vector<16x32xf32>, vector<32x64xf32>, vector<16x64xf32> -> vector<16x64xf32>
    %119 = arith.maximumf %115, %118 : vector<16x64xf32>
    %120 = vector.extract_strided_slice %5 {offsets = [1, 0, 0], sizes = [1, 16, 32], strides = [1, 1, 1]} : vector<3x16x32xf32> to vector<1x16x32xf32>
    %121 = vector.shape_cast %120 : vector<1x16x32xf32> to vector<16x32xf32>
    %cst_57 = arith.constant dense<0.000000e+00> : vector<16x64xf32>
    %122 = tpu.matmul %121, %0, %cst_57 {dimension_numbers = #tpu.dot_dimension_numbers<[1], [0], [0], [1], [0, 0, 1, 1], [], []>} : vector<16x32xf32>, vector<32x64xf32>, vector<16x64xf32> -> vector<16x64xf32>
    %c0_58 = arith.constant 0 : index
    %c0_59 = arith.constant 0 : index
    %123 = vector.load %arg3[%c0_58, %c0_59] : memref<64x64xf32, #tpu.memory_space<vmem>>, vector<64x64xf32>
    %cst_60 = arith.constant dense<0.000000e+00> : vector<16x64xf32>
    %124 = tpu.matmul %122, %123, %cst_60 {dimension_numbers = #tpu.dot_dimension_numbers<[1], [0], [0], [1], [0, 0, 1, 1], [], []>} : vector<16x64xf32>, vector<64x64xf32>, vector<16x64xf32> -> vector<16x64xf32>
    %125 = vector.extract_strided_slice %9 {offsets = [0, 0], sizes = [1, 64], strides = [1, 1]} : vector<2x64xf32> to vector<1x64xf32>
    %126 = vector.extract_strided_slice %9 {offsets = [1, 0], sizes = [1, 64], strides = [1, 1]} : vector<2x64xf32> to vector<1x64xf32>
    %cst_61 = arith.constant dense<0.000000e+00> : vector<64xf32>
    %127 = vector.multi_reduction <add>, %124, %cst_61 [0] : vector<16x64xf32> to vector<64xf32>
    %128 = vector.shape_cast %127 : vector<64xf32> to vector<1x64xf32>
    %129 = arith.mulf %124, %124 : vector<16x64xf32>
    %cst_62 = arith.constant dense<0.000000e+00> : vector<64xf32>
    %130 = vector.multi_reduction <add>, %129, %cst_62 [0] : vector<16x64xf32> to vector<64xf32>
    %131 = vector.shape_cast %130 : vector<64xf32> to vector<1x64xf32>
    %cst_63 = arith.constant dense<0.000000e+00> : vector<1x64xf32>
    %132 = tpu.matmul %128, %7, %cst_63 {dimension_numbers = #tpu.dot_dimension_numbers<[1], [0], [0], [1], [0, 0, 1, 1], [], []>} : vector<1x64xf32>, vector<64x64xf32>, vector<1x64xf32> -> vector<1x64xf32>
    %cst_64 = arith.constant 7.812500e-03 : f32
    %133 = vector.broadcast %cst_64 : f32 to vector<1x64xf32>
    %134 = arith.mulf %132, %133 : vector<1x64xf32>
    %cst_65 = arith.constant dense<0.000000e+00> : vector<1x64xf32>
    %135 = tpu.matmul %131, %7, %cst_65 {dimension_numbers = #tpu.dot_dimension_numbers<[1], [0], [0], [1], [0, 0, 1, 1], [], []>} : vector<1x64xf32>, vector<64x64xf32>, vector<1x64xf32> -> vector<1x64xf32>
    %cst_66 = arith.constant 7.812500e-03 : f32
    %136 = vector.broadcast %cst_66 : f32 to vector<1x64xf32>
    %137 = arith.mulf %135, %136 : vector<1x64xf32>
    %138 = arith.mulf %134, %134 : vector<1x64xf32>
    %139 = arith.subf %137, %138 : vector<1x64xf32>
    %cst_67 = arith.constant 0.000000e+00 : f32
    %140 = vector.broadcast %cst_67 : f32 to vector<1x64xf32>
    %141 = arith.maximumf %139, %140 : vector<1x64xf32>
    %cst_68 = arith.constant 9.99999974E-6 : f32
    %142 = vector.broadcast %cst_68 : f32 to vector<1x64xf32>
    %143 = arith.addf %141, %142 : vector<1x64xf32>
    %144 = math.rsqrt %143 : vector<1x64xf32>
    %145 = arith.mulf %125, %144 : vector<1x64xf32>
    %146 = arith.mulf %134, %145 : vector<1x64xf32>
    %147 = arith.subf %126, %146 : vector<1x64xf32>
    %148 = vector.broadcast %145 : vector<1x64xf32> to vector<16x64xf32>
    %149 = arith.mulf %124, %148 : vector<16x64xf32>
    %150 = vector.broadcast %147 : vector<1x64xf32> to vector<16x64xf32>
    %151 = arith.addf %149, %150 : vector<16x64xf32>
    %152 = arith.addf %119, %151 : vector<16x64xf32>
    %c0_69 = arith.constant 0 : index
    %c0_70 = arith.constant 0 : index
    %153 = vector.load %arg11[%c0_69, %c0_70] : memref<16x64xf32, #tpu.memory_space<vmem>>, vector<16x64xf32>
    tpu.vector_store %arg11[%c0_69, %c0_70], %152 {strides = array<i32>} : memref<16x64xf32, #tpu.memory_space<vmem>>, vector<16x64xf32>,
    return
  }
}

</mosaic_0001>

<llo_original>
// kernel: block_forward.1
$region0: #{block_forward.1}
  #allocation0 [shape = 'u32[]', space=smem, size = 0x4, offset = 0x4, fixed_abs, tag = 'smem constant byte address 0x4 - core index']
  #allocation1 [shape = 'u32[72,128]{1,0:T(1,128)}', space=vmem, size = 0x9000, scoped, tag = 'internal scratch']
  %s0 = inlined_call_operand.vmem [shape: f32[32,64], index: 0, kind: input, shape index: {}]
  %s1 = inlined_call_operand.vmem [shape: f32[3,64,128], index: 1, kind: input, shape index: {}]
  %s2 = inlined_call_operand.vmem [shape: f32[3,128,128], index: 2, kind: input, shape index: {}]
  %s3 = inlined_call_operand.vmem [shape: f32[64,64], index: 3, kind: input, shape index: {}]
  %s4 = inlined_call_operand.vmem [shape: f32[2,32,32], index: 4, kind: input, shape index: {}]
  %s5 = inlined_call_operand.vmem [shape: f32[3,128,64], index: 5, kind: input, shape index: {}]
  %s6 = inlined_call_operand.vmem [shape: f32[3,16,32], index: 6, kind: input, shape index: {}]
  %s7 = inlined_call_operand.vmem [shape: f32[128,128], index: 7, kind: input, shape index: {}]
  %s8 = inlined_call_operand.vmem [shape: f32[64,64], index: 8, kind: input, shape index: {}]
  %s9 = inlined_call_operand.vmem [shape: f32[4,128], index: 9, kind: input, shape index: {}]
  %s10 = inlined_call_operand.vmem [shape: f32[2,64], index: 10, kind: input, shape index: {}]
  %s11 = inlined_call_operand.vmem [shape: f32[16,64], index: 11, kind: output, shape index: {}]
  %s12 = sld [smem:[#allocation0]]
  $region54: #{block_forward.1} parent=0
    _
  %s14 = ssub.s32 1, %s12
  %s15 = scalar_select 0, %s14, %s12
  // Predicated region
  $region2: #{block_forward.1} parent=0 // pred_check
    _
  $region3: #{block_forward.1} parent=0 // pred_check_branch
    %17 = sbr.rel (0) target = $region5
  $region4: #{block_forward.1} parent=0 // pred_region
    _
  $region5: #{block_forward.1} parent=0 // pred_fallthru
    _
  // Predicated region
  $region6: #{block_forward.1} parent=0 // pred_check
    _
  $region7: #{block_forward.1} parent=0 // pred_check_branch
    %19 = sbr.rel (0) target = $region9
  $region8: #{block_forward.1} parent=0 // pred_region
    _
  $region9: #{block_forward.1} parent=0 // pred_fallthru
    _
  // Predicated region
  $region10: #{block_forward.1} parent=0 // pred_check
    _
  $region11: #{block_forward.1} parent=0 // pred_check_branch
    %21 = sbr.rel (0) target = $region13
  $region12: #{block_forward.1} parent=0 // pred_region
    _
  $region13: #{block_forward.1} parent=0 // pred_fallthru
    _
  // Predicated region
  $region14: #{block_forward.1} parent=0 // pred_check
    _
  $region15: #{block_forward.1} parent=0 // pred_check_branch
    %23 = sbr.rel (0) target = $region17
  $region16: #{block_forward.1} parent=0 // pred_region
    _
  $region17: #{block_forward.1} parent=0 // pred_fallthru
    _
  // Predicated region
  $region18: #{block_forward.1} parent=0 // pred_check
    _
  $region19: #{block_forward.1} parent=0 // pred_check_branch
    %25 = sbr.rel (0) target = $region21
  $region20: #{block_forward.1} parent=0 // pred_region
    _
  $region21: #{block_forward.1} parent=0 // pred_fallthru
    _
  // Predicated region
  $region22: #{block_forward.1} parent=0 // pred_check
    _
  $region23: #{block_forward.1} parent=0 // pred_check_branch
    %27 = sbr.rel (0) target = $region25
  $region24: #{block_forward.1} parent=0 // pred_region
    _
  $region25: #{block_forward.1} parent=0 // pred_fallthru
    _
  // Predicated region
  $region26: #{block_forward.1} parent=0 // pred_check
    _
  $region27: #{block_forward.1} parent=0 // pred_check_branch
    %29 = sbr.rel (0) target = $region29
  $region28: #{block_forward.1} parent=0 // pred_region
    _
  $region29: #{block_forward.1} parent=0 // pred_fallthru
    _
  // Predicated region
  $region30: #{block_forward.1} parent=0 // pred_check
    _
  $region31: #{block_forward.1} parent=0 // pred_check_branch
    %31 = sbr.rel (0) target = $region33
  $region32: #{block_forward.1} parent=0 // pred_region
    _
  $region33: #{block_forward.1} parent=0 // pred_fallthru
    _
  // Predicated region
  $region34: #{block_forward.1} parent=0 // pred_check
    _
  $region35: #{block_forward.1} parent=0 // pred_check_branch
    %33 = sbr.rel (0) target = $region37
  $region36: #{block_forward.1} parent=0 // pred_region
    _
  $region37: #{block_forward.1} parent=0 // pred_fallthru
    _
  // Predicated region
  $region38: #{block_forward.1} parent=0 // pred_check
    _
  $region39: #{block_forward.1} parent=0 // pred_check_branch
    %35 = sbr.rel (0) target = $region41
  $region40: #{block_forward.1} parent=0 // pred_region
    _
  $region41: #{block_forward.1} parent=0 // pred_fallthru
    _
  // Predicated region
  $region42: #{block_forward.1} parent=0 // pred_check
    _
  $region43: #{block_forward.1} parent=0 // pred_check_branch
    %37 = sbr.rel (0) target = $region45
  $region44: #{block_forward.1} parent=0 // pred_region
    _
  $region45: #{block_forward.1} parent=0 // pred_fallthru
    _
  %v38 = vld [vmem:[%s0] sm:$0xff]
  %v39 = vld [vmem:[%s0 + $0x8] sm:$0xff]
  %v40 = vld [vmem:[%s0 + $0x10] sm:$0xff]
  %v41 = vld [vmem:[%s0 + $0x18] sm:$0xff]
  %v42 = vld [vmem:[%s1] sm:$0xff]
  %v43 = vld [vmem:[%s1 + $0x8] sm:$0xff]
  %v44 = vld [vmem:[%s1 + $0x10] sm:$0xff]
  %v45 = vld [vmem:[%s1 + $0x18] sm:$0xff]
  %v46 = vld [vmem:[%s1 + $0x20] sm:$0xff]
  %v47 = vld [vmem:[%s1 + $0x28] sm:$0xff]
  %v48 = vld [vmem:[%s1 + $0x30] sm:$0xff]
  %v49 = vld [vmem:[%s1 + $0x38] sm:$0xff]
  %v50 = vld [vmem:[%s1 + $0x40] sm:$0xff]
  %v51 = vld [vmem:[%s1 + $0x48] sm:$0xff]
  %v52 = vld [vmem:[%s1 + $0x50] sm:$0xff]
  %v53 = vld [vmem:[%s1 + $0x58] sm:$0xff]
  %v54 = vld [vmem:[%s1 + $0x60] sm:$0xff]
  %v55 = vld [vmem:[%s1 + $0x68] sm:$0xff]
  %v56 = vld [vmem:[%s1 + $0x70] sm:$0xff]
  %v57 = vld [vmem:[%s1 + $0x78] sm:$0xff]
  %v58 = vld [vmem:[%s1 + $0x80] sm:$0xff]
  %v59 = vld [vmem:[%s1 + $0x88] sm:$0xff]
  %v60 = vld [vmem:[%s1 + $0x90] sm:$0xff]
  %v61 = vld [vmem:[%s1 + $0x98] sm:$0xff]
  %v62 = vld [vmem:[%s1 + $0xa0] sm:$0xff]
  %v63 = vld [vmem:[%s1 + $0xa8] sm:$0xff]
  %v64 = vld [vmem:[%s1 + $0xb0] sm:$0xff]
  %v65 = vld [vmem:[%s1 + $0xb8] sm:$0xff]
  %v66 = vld [vmem:[%s2] sm:$0xff]
  %v67 = vld [vmem:[%s2 + $0x8] sm:$0xff]
  %v68 = vld [vmem:[%s2 + $0x10] sm:$0xff]
  %v69 = vld [vmem:[%s2 + $0x18] sm:$0xff]
  %v70 = vld [vmem:[%s2 + $0x20] sm:$0xff]
  %v71 = vld [vmem:[%s2 + $0x28] sm:$0xff]
  %v72 = vld [vmem:[%s2 + $0x30] sm:$0xff]
  %v73 = vld [vmem:[%s2 + $0x38] sm:$0xff]
  %v74 = vld [vmem:[%s2 + $0x40] sm:$0xff]
  %v75 = vld [vmem:[%s2 + $0x48] sm:$0xff]
  %v76 = vld [vmem:[%s2 + $0x50] sm:$0xff]
  %v77 = vld [vmem:[%s2 + $0x58] sm:$0xff]
  %v78 = vld [vmem:[%s2 + $0x60] sm:$0xff]
  %v79 = vld [vmem:[%s2 + $0x68] sm:$0xff]
  %v80 = vld [vmem:[%s2 + $0x70] sm:$0xff]
  %v81 = vld [vmem:[%s2 + $0x78] sm:$0xff]
  %v82 = vld [vmem:[%s2 + $0x80] sm:$0xff]
  %v83 = vld [vmem:[%s2 + $0x88] sm:$0xff]
  %v84 = vld [vmem:[%s2 + $0x90] sm:$0xff]
  %v85 = vld [vmem:[%s2 + $0x98] sm:$0xff]
  %v86 = vld [vmem:[%s2 + $0xa0] sm:$0xff]
  %v87 = vld [vmem:[%s2 + $0xa8] sm:$0xff]
  %v88 = vld [vmem:[%s2 + $0xb0] sm:$0xff]
  %v89 = vld [vmem:[%s2 + $0xb8] sm:$0xff]
  %v90 = vld [vmem:[%s2 + $0xc0] sm:$0xff]
  %v91 = vld [vmem:[%s2 + $0xc8] sm:$0xff]
  %v92 = vld [vmem:[%s2 + $0xd0] sm:$0xff]
  %v93 = vld [vmem:[%s2 + $0xd8] sm:$0xff]
  %v94 = vld [vmem:[%s2 + $0xe0] sm:$0xff]
  %v95 = vld [vmem:[%s2 + $0xe8] sm:$0xff]
  %v96 = vld [vmem:[%s2 + $0xf0] sm:$0xff]
  %v97 = vld [vmem:[%s2 + $0xf8] sm:$0xff]
  %v98 = vld [vmem:[%s2 + $0x100] sm:$0xff]
  %v99 = vld [vmem:[%s2 + $0x108] sm:$0xff]
  %v100 = vld [vmem:[%s2 + $0x110] sm:$0xff]
  %v101 = vld [vmem:[%s2 + $0x118] sm:$0xff]
  %v102 = vld [vmem:[%s2 + $0x120] sm:$0xff]
  %v103 = vld [vmem:[%s2 + $0x128] sm:$0xff]
  %v104 = vld [vmem:[%s2 + $0x130] sm:$0xff]
  %v105 = vld [vmem:[%s2 + $0x138] sm:$0xff]
  %v106 = vld [vmem:[%s2 + $0x140] sm:$0xff]
  %v107 = vld [vmem:[%s2 + $0x148] sm:$0xff]
  %v108 = vld [vmem:[%s2 + $0x150] sm:$0xff]
  %v109 = vld [vmem:[%s2 + $0x158] sm:$0xff]
  %v110 = vld [vmem:[%s2 + $0x160] sm:$0xff]
  %v111 = vld [vmem:[%s2 + $0x168] sm:$0xff]
  %v112 = vld [vmem:[%s2 + $0x170] sm:$0xff]
  %v113 = vld [vmem:[%s2 + $0x178] sm:$0xff]
  %v114 = vld [vmem:[%s4] sm:$0xff]
  %v115 = vld [vmem:[%s4 + $0x8] sm:$0xff]
  %v116 = vld [vmem:[%s4 + $0x10] sm:$0xff]
  %v117 = vld [vmem:[%s4 + $0x18] sm:$0xff]
  %v118 = vld [vmem:[%s4 + $0x20] sm:$0xff]
  %v119 = vld [vmem:[%s4 + $0x28] sm:$0xff]
  %v120 = vld [vmem:[%s4 + $0x30] sm:$0xff]
  %v121 = vld [vmem:[%s4 + $0x38] sm:$0xff]
  %v122 = vld [vmem:[%s5] sm:$0xff]
  %v123 = vld [vmem:[%s5 + $0x8] sm:$0xff]
  %v124 = vld [vmem:[%s5 + $0x10] sm:$0xff]
  %v125 = vld [vmem:[%s5 + $0x18] sm:$0xff]
  %v126 = vld [vmem:[%s5 + $0x20] sm:$0xff]
  %v127 = vld [vmem:[%s5 + $0x28] sm:$0xff]
  %v128 = vld [vmem:[%s5 + $0x30] sm:$0xff]
  %v129 = vld [vmem:[%s5 + $0x38] sm:$0xff]
  %v130 = vld [vmem:[%s5 + $0x40] sm:$0xff]
  %v131 = vld [vmem:[%s5 + $0x48] sm:$0xff]
  %v132 = vld [vmem:[%s5 + $0x50] sm:$0xff]
  %v133 = vld [vmem:[%s5 + $0x58] sm:$0xff]
  %v134 = vld [vmem:[%s5 + $0x60] sm:$0xff]
  %v135 = vld [vmem:[%s5 + $0x68] sm:$0xff]
  %v136 = vld [vmem:[%s5 + $0x70] sm:$0xff]
  %v137 = vld [vmem:[%s5 + $0x78] sm:$0xff]
  %v138 = vld [vmem:[%s5 + $0x80] sm:$0xff]
  %v139 = vld [vmem:[%s5 + $0x88] sm:$0xff]
  %v140 = vld [vmem:[%s5 + $0x90] sm:$0xff]
  %v141 = vld [vmem:[%s5 + $0x98] sm:$0xff]
  %v142 = vld [vmem:[%s5 + $0xa0] sm:$0xff]
  %v143 = vld [vmem:[%s5 + $0xa8] sm:$0xff]
  %v144 = vld [vmem:[%s5 + $0xb0] sm:$0xff]
  %v145 = vld [vmem:[%s5 + $0xb8] sm:$0xff]
  %v146 = vld [vmem:[%s5 + $0xc0] sm:$0xff]
  %v147 = vld [vmem:[%s5 + $0xc8] sm:$0xff]
  %v148 = vld [vmem:[%s5 + $0xd0] sm:$0xff]
  %v149 = vld [vmem:[%s5 + $0xd8] sm:$0xff]
  %v150 = vld [vmem:[%s5 + $0xe0] sm:$0xff]
  %v151 = vld [vmem:[%s5 + $0xe8] sm:$0xff]
  %v152 = vld [vmem:[%s5 + $0xf0] sm:$0xff]
  %v153 = vld [vmem:[%s5 + $0xf8] sm:$0xff]
  %v154 = vld [vmem:[%s5 + $0x100] sm:$0xff]
  %v155 = vld [vmem:[%s5 + $0x108] sm:$0xff]
  %v156 = vld [vmem:[%s5 + $0x110] sm:$0xff]
  %v157 = vld [vmem:[%s5 + $0x118] sm:$0xff]
  %v158 = vld [vmem:[%s5 + $0x120] sm:$0xff]
  %v159 = vld [vmem:[%s5 + $0x128] sm:$0xff]
  %v160 = vld [vmem:[%s5 + $0x130] sm:$0xff]
  %v161 = vld [vmem:[%s5 + $0x138] sm:$0xff]
  %v162 = vld [vmem:[%s5 + $0x140] sm:$0xff]
  %v163 = vld [vmem:[%s5 + $0x148] sm:$0xff]
  %v164 = vld [vmem:[%s5 + $0x150] sm:$0xff]
  %v165 = vld [vmem:[%s5 + $0x158] sm:$0xff]
  %v166 = vld [vmem:[%s5 + $0x160] sm:$0xff]
  %v167 = vld [vmem:[%s5 + $0x168] sm:$0xff]
  %v168 = vld [vmem:[%s5 + $0x170] sm:$0xff]
  %v169 = vld [vmem:[%s5 + $0x178] sm:$0xff]
  %v170 = vld [vmem:[%s6] sm:$0xff]
  %v171 = vld [vmem:[%s6 + $0x8] sm:$0xff]
  %v172 = vld [vmem:[%s6 + $0x10] sm:$0xff]
  %v173 = vld [vmem:[%s6 + $0x18] sm:$0xff]
  %v174 = vld [vmem:[%s6 + $0x20] sm:$0xff]
  %v175 = vld [vmem:[%s6 + $0x28] sm:$0xff]
  %v176 = vld [vmem:[%s7] sm:$0xff]
  %v177 = vld [vmem:[%s7 + $0x8] sm:$0xff]
  %v178 = vld [vmem:[%s7 + $0x10] sm:$0xff]
  %v179 = vld [vmem:[%s7 + $0x18] sm:$0xff]
  %v180 = vld [vmem:[%s7 + $0x20] sm:$0xff]
  %v181 = vld [vmem:[%s7 + $0x28] sm:$0xff]
  %v182 = vld [vmem:[%s7 + $0x30] sm:$0xff]
  %v183 = vld [vmem:[%s7 + $0x38] sm:$0xff]
  %v184 = vld [vmem:[%s7 + $0x40] sm:$0xff]
  %v185 = vld [vmem:[%s7 + $0x48] sm:$0xff]
  %v186 = vld [vmem:[%s7 + $0x50] sm:$0xff]
  %v187 = vld [vmem:[%s7 + $0x58] sm:$0xff]
  %v188 = vld [vmem:[%s7 + $0x60] sm:$0xff]
  %v189 = vld [vmem:[%s7 + $0x68] sm:$0xff]
  %v190 = vld [vmem:[%s7 + $0x70] sm:$0xff]
  %v191 = vld [vmem:[%s7 + $0x78] sm:$0xff]
  %v192 = vld [vmem:[%s8] sm:$0xff]
  %v193 = vld [vmem:[%s8 + $0x8] sm:$0xff]
  %v194 = vld [vmem:[%s8 + $0x10] sm:$0xff]
  %v195 = vld [vmem:[%s8 + $0x18] sm:$0xff]
  %v196 = vld [vmem:[%s8 + $0x20] sm:$0xff]
  %v197 = vld [vmem:[%s8 + $0x28] sm:$0xff]
  %v198 = vld [vmem:[%s8 + $0x30] sm:$0xff]
  %v199 = vld [vmem:[%s8 + $0x38] sm:$0xff]
  %v200 = vld [vmem:[%s9] sm:$0xf]
  %v201 = vld [vmem:[%s10] sm:$0x3]
  %v202 = vmax.f32 %v38, 0.0
  %v203 = vmax.f32 %v39, 0.0
  %v204 = vmax.f32 %v40, 0.0
  %v205 = vmax.f32 %v41, 0.0
  %vm206 = vcmask 261120
  %v208 = vsel %vm206, %v114, 0
  %v211 = vsel %vm206, %v115, 0
  %v214 = vsel %vm206, %v116, 0
  %v217 = vsel %vm206, %v117, 0
  %219 = vmatpush.msra.mxu0 0.0
  %220 = vmatpush.msra.mxu0 0.0
  %221 = vmatpush.msra.mxu0 0.0
  %222 = vmatpush.msra.mxu0 0.0
  %223 = vmatpush.msra.mxu0 0.0
  %224 = vmatpush.msra.mxu0 0.0
  %225 = vmatpush.msra.mxu0 0.0
  %226 = vmatpush.msra.mxu0 0.0
  %227 = vmatpush.msra.mxu0 0.0
  %228 = vmatpush.msra.mxu0 0.0
  %229 = vmatpush.msra.mxu0 0.0
  %230 = vmatpush.msra.mxu0 0.0
  %231 = vmatpush.msra.mxu0 %v205
  %232 = vmatpush.msra.mxu0 %v204
  %233 = vmatpush.msra.mxu0 %v203
  %234 = vmatpush.msra.mxu0 %v202
  %235 = vmatmul.f32.gmra.mxu0 %v208
  %v236 = vpop.f32.mrf.mxu0
  %v237 = vadd.f32 0.0, %v236
  %238 = vmatmul.f32.gmra.mxu0 %v211
  %v239 = vpop.f32.mrf.mxu0
  %v240 = vadd.f32 0.0, %v239
  %241 = vmatmul.f32.gmra.mxu0 %v214
  %v242 = vpop.f32.mrf.mxu0
  %v243 = vadd.f32 0.0, %v242
  %244 = vmatmul.f32.gmra.mxu0 %v217
  %v245 = vpop.f32.mrf.mxu0
  %v246 = vadd.f32 0.0, %v245
  %247 = vdwg.mxu0
  %v249 = vsel %vm206, %v118, 0
  %v252 = vsel %vm206, %v119, 0
  %v255 = vsel %vm206, %v120, 0
  %v258 = vsel %vm206, %v121, 0
  %260 = vmatpush.msra.mxu0 0.0
  %261 = vmatpush.msra.mxu0 0.0
  %262 = vmatpush.msra.mxu0 0.0
  %263 = vmatpush.msra.mxu0 0.0
  %264 = vmatpush.msra.mxu0 0.0
  %265 = vmatpush.msra.mxu0 0.0
  %266 = vmatpush.msra.mxu0 0.0
  %267 = vmatpush.msra.mxu0 0.0
  %268 = vmatpush.msra.mxu0 0.0
  %269 = vmatpush.msra.mxu0 0.0
  %270 = vmatpush.msra.mxu0 0.0
  %271 = vmatpush.msra.mxu0 0.0
  %272 = vmatpush.msra.mxu0 %v205
  %273 = vmatpush.msra.mxu0 %v204
  %274 = vmatpush.msra.mxu0 %v203
  %275 = vmatpush.msra.mxu0 %v202
  %276 = vmatmul.f32.gmra.mxu0 %v249
  %v277 = vpop.f32.mrf.mxu0
  %v278 = vadd.f32 0.0, %v277
  %279 = vmatmul.f32.gmra.mxu0 %v252
  %v280 = vpop.f32.mrf.mxu0
  %v281 = vadd.f32 0.0, %v280
  %282 = vmatmul.f32.gmra.mxu0 %v255
  %v283 = vpop.f32.mrf.mxu0
  %v284 = vadd.f32 0.0, %v283
  %285 = vmatmul.f32.gmra.mxu0 %v258
  %v286 = vpop.f32.mrf.mxu0
  %v287 = vadd.f32 0.0, %v286
  %288 = vdwg.mxu0
  %vm289 = vcmask 523264
  %v291 = vsel %vm289, %v237, 0
  %v294 = vsel %vm289, %v240, 0
  %v297 = vsel %vm289, %v243, 0
  %v300 = vsel %vm289, %v246, 0
  %302 = vmatpush.msra.mxu0 0.0
  %303 = vmatpush.msra.mxu0 0.0
  %304 = vmatpush.msra.mxu0 0.0
  %305 = vmatpush.msra.mxu0 0.0
  %306 = vmatpush.msra.mxu0 0.0
  %307 = vmatpush.msra.mxu0 0.0
  %308 = vmatpush.msra.mxu0 0.0
  %309 = vmatpush.msra.mxu0 0.0
  %310 = vmatpush.msra.mxu0 %v49
  %311 = vmatpush.msra.mxu0 %v48
  %312 = vmatpush.msra.mxu0 %v47
  %313 = vmatpush.msra.mxu0 %v46
  %314 = vmatpush.msra.mxu0 %v45
  %315 = vmatpush.msra.mxu0 %v44
  %316 = vmatpush.msra.mxu0 %v43
  %317 = vmatpush.msra.mxu0 %v42
  %318 = vmatmul.f32.gmra.mxu0 %v291
  %v319 = vpop.f32.mrf.mxu0
  %v320 = vadd.f32 0.0, %v319
  %321 = vmatmul.f32.gmra.mxu0 %v294
  %v322 = vpop.f32.mrf.mxu0
  %v323 = vadd.f32 0.0, %v322
  %324 = vmatmul.f32.gmra.mxu0 %v297
  %v325 = vpop.f32.mrf.mxu0
  %v326 = vadd.f32 0.0, %v325
  %327 = vmatmul.f32.gmra.mxu0 %v300
  %v328 = vpop.f32.mrf.mxu0
  %v329 = vadd.f32 0.0, %v328
  %330 = vdwg.mxu0
  %v332 = vsel %vm289, %v202, 0
  %v335 = vsel %vm289, %v203, 0
  %v338 = vsel %vm289, %v204, 0
  %v341 = vsel %vm289, %v205, 0
  %343 = vmatpush.msra.mxu0 0.0
  %344 = vmatpush.msra.mxu0 0.0
  %345 = vmatpush.msra.mxu0 0.0
  %346 = vmatpush.msra.mxu0 0.0
  %347 = vmatpush.msra.mxu0 0.0
  %348 = vmatpush.msra.mxu0 0.0
  %349 = vmatpush.msra.mxu0 0.0
  %350 = vmatpush.msra.mxu0 0.0
  %351 = vmatpush.msra.mxu0 %v57
  %352 = vmatpush.msra.mxu0 %v56
  %353 = vmatpush.msra.mxu0 %v55
  %354 = vmatpush.msra.mxu0 %v54
  %355 = vmatpush.msra.mxu0 %v53
  %356 = vmatpush.msra.mxu0 %v52
  %357 = vmatpush.msra.mxu0 %v51
  %358 = vmatpush.msra.mxu0 %v50
  %359 = vmatmul.f32.gmra.mxu0 %v332
  %v360 = vpop.f32.mrf.mxu0
  %v361 = vadd.f32 %v320, %v360
  %362 = vmatmul.f32.gmra.mxu0 %v335
  %v363 = vpop.f32.mrf.mxu0
  %v364 = vadd.f32 %v323, %v363
  %365 = vmatmul.f32.gmra.mxu0 %v338
  %v366 = vpop.f32.mrf.mxu0
  %v367 = vadd.f32 %v326, %v366
  %368 = vmatmul.f32.gmra.mxu0 %v341
  %v369 = vpop.f32.mrf.mxu0
  %v370 = vadd.f32 %v329, %v369
  %371 = vdwg.mxu0
  %v373 = vsel %vm289, %v278, 0
  %v376 = vsel %vm289, %v281, 0
  %v379 = vsel %vm289, %v284, 0
  %v382 = vsel %vm289, %v287, 0
  %384 = vmatpush.msra.mxu0 0.0
  %385 = vmatpush.msra.mxu0 0.0
  %386 = vmatpush.msra.mxu0 0.0
  %387 = vmatpush.msra.mxu0 0.0
  %388 = vmatpush.msra.mxu0 0.0
  %389 = vmatpush.msra.mxu0 0.0
  %390 = vmatpush.msra.mxu0 0.0
  %391 = vmatpush.msra.mxu0 0.0
  %392 = vmatpush.msra.mxu0 %v65
  %393 = vmatpush.msra.mxu0 %v64
  %394 = vmatpush.msra.mxu0 %v63
  %395 = vmatpush.msra.mxu0 %v62
  %396 = vmatpush.msra.mxu0 %v61
  %397 = vmatpush.msra.mxu0 %v60
  %398 = vmatpush.msra.mxu0 %v59
  %399 = vmatpush.msra.mxu0 %v58
  %400 = vmatmul.f32.gmra.mxu0 %v373
  %v401 = vpop.f32.mrf.mxu0
  %v402 = vadd.f32 0.0, %v401
  %403 = vmatmul.f32.gmra.mxu0 %v376
  %v404 = vpop.f32.mrf.mxu0
  %v405 = vadd.f32 0.0, %v404
  %406 = vmatmul.f32.gmra.mxu0 %v379
  %v407 = vpop.f32.mrf.mxu0
  %v408 = vadd.f32 0.0, %v407
  %409 = vmatmul.f32.gmra.mxu0 %v382
  %v410 = vpop.f32.mrf.mxu0
  %v411 = vadd.f32 0.0, %v410
  %412 = vdwg.mxu0
  %v413 = vadd.f32 %v361, %v402
  %v414 = vadd.f32 %v364, %v405
  %v415 = vadd.f32 %v367, %v408
  %v416 = vadd.f32 %v370, %v411
  %v417 = vadd.f32 %v413, %v414
  %v418 = vadd.f32 %v417, %v415
  %v419 = vadd.f32 %v418, %v416
  %v420 = vrot.slane %v419, 4
  %v421 = vadd.f32 %v419, %v420
  %v422 = vrot.slane %v421, 2
  %v423 = vadd.f32 %v421, %v422
  %v424 = vrot.slane %v423, 1
  %v425 = vadd.f32 %v423, %v424
  %v426 = vmul.f32 %v413, %v413
  %v427 = vmul.f32 %v414, %v414
  %v428 = vmul.f32 %v415, %v415
  %v429 = vmul.f32 %v416, %v416
  %v430 = vadd.f32 %v426, %v427
  %v431 = vadd.f32 %v430, %v428
  %v432 = vadd.f32 %v431, %v429
  %v433 = vrot.slane %v432, 4
  %v434 = vadd.f32 %v432, %v433
  %v435 = vrot.slane %v434, 2
  %v436 = vadd.f32 %v434, %v435
  %v437 = vrot.slane %v436, 1
  %v438 = vadd.f32 %v436, %v437
  %439 = vmatpush.msra.mxu0 %v191
  %440 = vmatpush.msra.mxu0 %v190
  %441 = vmatpush.msra.mxu0 %v189
  %442 = vmatpush.msra.mxu0 %v188
  %443 = vmatpush.msra.mxu0 %v187
  %444 = vmatpush.msra.mxu0 %v186
  %445 = vmatpush.msra.mxu0 %v185
  %446 = vmatpush.msra.mxu0 %v184
  %447 = vmatpush.msra.mxu0 %v183
  %448 = vmatpush.msra.mxu0 %v182
  %449 = vmatpush.msra.mxu0 %v181
  %450 = vmatpush.msra.mxu0 %v180
  %451 = vmatpush.msra.mxu0 %v179
  %452 = vmatpush.msra.mxu0 %v178
  %453 = vmatpush.msra.mxu0 %v177
  %454 = vmatpush.msra.mxu0 %v176
  %455 = vmatmul.f32.gmra.mxu0 %v425
  %v456 = vpop.f32.mrf.mxu0
  %v457 = vadd.f32 0.0, %v456
  %458 = vdwg.mxu0
  %v459 = vmul.f32 %v457, 0.001953125
  %460 = vmatpush.msra.mxu0 %v191
  %461 = vmatpush.msra.mxu0 %v190
  %462 = vmatpush.msra.mxu0 %v189
  %463 = vmatpush.msra.mxu0 %v188
  %464 = vmatpush.msra.mxu0 %v187
  %465 = vmatpush.msra.mxu0 %v186
  %466 = vmatpush.msra.mxu0 %v185
  %467 = vmatpush.msra.mxu0 %v184
  %468 = vmatpush.msra.mxu0 %v183
  %469 = vmatpush.msra.mxu0 %v182
  %470 = vmatpush.msra.mxu0 %v181
  %471 = vmatpush.msra.mxu0 %v180
  %472 = vmatpush.msra.mxu0 %v179
  %473 = vmatpush.msra.mxu0 %v178
  %474 = vmatpush.msra.mxu0 %v177
  %475 = vmatpush.msra.mxu0 %v176
  %476 = vmatmul.f32.gmra.mxu0 %v438
  %v477 = vpop.f32.mrf.mxu0
  %v478 = vadd.f32 0.0, %v477
  %479 = vdwg.mxu0
  %v480 = vmul.f32 %v478, 0.001953125
  %v481 = vmul.f32 %v459, %v459
  %v482 = vsub.f32 %v480, %v481
  %v483 = vmax.f32 %v482, 0.0
  %v484 = vadd.f32 %v483, 1e-05
  %v485 = vrsqrt.pop %v484
  %v486 = vmul.f32 %v485, %v484
  %v487 = vmul.f32 %v486, %v485
  %v488 = vmul.f32 0.5, %v487
  %v489 = vsub.f32 1.5, %v488
  %v490 = vmul.f32 %v485, %v489
  %vm491 = vweird.f32 %v484
  %vm492 = vweird.f32 %v485
  %vm493 = vmor %vm491, %vm492
  %v494 = vsel %vm493, %v485, %v490
  %v495 = vmul.f32 %v200, %v494
  %v496 = vmul.f32 %v459, %v495
  %v498 = vrot.slane %v496, 7
  %v500 = vsub.f32 %v200, %v498
  %v501 = vperm.slane %v495, 0
  %v502 = vmul.f32 %v413, %v501
  %v503 = vmul.f32 %v414, %v501
  %v504 = vmul.f32 %v415, %v501
  %v505 = vmul.f32 %v416, %v501
  %v506 = vperm.slane %v500, 1
  %v507 = vadd.f32 %v502, %v506
  %v508 = vadd.f32 %v503, %v506
  %v509 = vadd.f32 %v504, %v506
  %v510 = vadd.f32 %v505, %v506
  %v511 = vmax.f32 %v507, 0.0
  %v512 = vmax.f32 %v508, 0.0
  %v513 = vmax.f32 %v509, 0.0
  %v514 = vmax.f32 %v510, 0.0
  %515 = vmatpush.msra.mxu0 0.0
  %516 = vmatpush.msra.mxu0 0.0
  %517 = vmatpush.msra.mxu0 0.0
  %518 = vmatpush.msra.mxu0 0.0
  %519 = vmatpush.msra.mxu0 0.0
  %520 = vmatpush.msra.mxu0 0.0
  %521 = vmatpush.msra.mxu0 0.0
  %522 = vmatpush.msra.mxu0 0.0
  %523 = vmatpush.msra.mxu0 0.0
  %524 = vmatpush.msra.mxu0 0.0
  %525 = vmatpush.msra.mxu0 0.0
  %526 = vmatpush.msra.mxu0 0.0
  %527 = vmatpush.msra.mxu0 %v514
  %528 = vmatpush.msra.mxu0 %v513
  %529 = vmatpush.msra.mxu0 %v512
  %530 = vmatpush.msra.mxu0 %v511
  %531 = vmatmul.f32.gmra.mxu0 %v208
  %v532 = vpop.f32.mrf.mxu0
  %v533 = vadd.f32 0.0, %v532
  %534 = vmatmul.f32.gmra.mxu0 %v211
  %v535 = vpop.f32.mrf.mxu0
  %v536 = vadd.f32 0.0, %v535
  %537 = vmatmul.f32.gmra.mxu0 %v214
  %v538 = vpop.f32.mrf.mxu0
  %v539 = vadd.f32 0.0, %v538
  %540 = vmatmul.f32.gmra.mxu0 %v217
  %v541 = vpop.f32.mrf.mxu0
  %v542 = vadd.f32 0.0, %v541
  %543 = vdwg.mxu0
  %544 = vmatpush.msra.mxu0 0.0
  %545 = vmatpush.msra.mxu0 0.0
  %546 = vmatpush.msra.mxu0 0.0
  %547 = vmatpush.msra.mxu0 0.0
  %548 = vmatpush.msra.mxu0 0.0
  %549 = vmatpush.msra.mxu0 0.0
  %550 = vmatpush.msra.mxu0 0.0
  %551 = vmatpush.msra.mxu0 0.0
  %552 = vmatpush.msra.mxu0 0.0
  %553 = vmatpush.msra.mxu0 0.0
  %554 = vmatpush.msra.mxu0 0.0
  %555 = vmatpush.msra.mxu0 0.0
  %556 = vmatpush.msra.mxu0 %v514
  %557 = vmatpush.msra.mxu0 %v513
  %558 = vmatpush.msra.mxu0 %v512
  %559 = vmatpush.msra.mxu0 %v511
  %560 = vmatmul.f32.gmra.mxu0 %v249
  %v561 = vpop.f32.mrf.mxu0
  %v562 = vadd.f32 0.0, %v561
  %563 = vmatmul.f32.gmra.mxu0 %v252
  %v564 = vpop.f32.mrf.mxu0
  %v565 = vadd.f32 0.0, %v564
  %566 = vmatmul.f32.gmra.mxu0 %v255
  %v567 = vpop.f32.mrf.mxu0
  %v568 = vadd.f32 0.0, %v567
  %569 = vmatmul.f32.gmra.mxu0 %v258
  %v570 = vpop.f32.mrf.mxu0
  %v571 = vadd.f32 0.0, %v570
  %572 = vdwg.mxu0
  %573 = vmatpush.msra.mxu0 %v81
  %574 = vmatpush.msra.mxu0 %v80
  %575 = vmatpush.msra.mxu0 %v79
  %576 = vmatpush.msra.mxu0 %v78
  %577 = vmatpush.msra.mxu0 %v77
  %578 = vmatpush.msra.mxu0 %v76
  %579 = vmatpush.msra.mxu0 %v75
  %580 = vmatpush.msra.mxu0 %v74
  %581 = vmatpush.msra.mxu0 %v73
  %582 = vmatpush.msra.mxu0 %v72
  %583 = vmatpush.msra.mxu0 %v71
  %584 = vmatpush.msra.mxu0 %v70
  %585 = vmatpush.msra.mxu0 %v69
  %586 = vmatpush.msra.mxu0 %v68
  %587 = vmatpush.msra.mxu0 %v67
  %588 = vmatpush.msra.mxu0 %v66
  %589 = vmatmul.f32.gmra.mxu0 %v533
  %v590 = vpop.f32.mrf.mxu0
  %v591 = vadd.f32 0.0, %v590
  %592 = vmatmul.f32.gmra.mxu0 %v536
  %v593 = vpop.f32.mrf.mxu0
  %v594 = vadd.f32 0.0, %v593
  %595 = vmatmul.f32.gmra.mxu0 %v539
  %v596 = vpop.f32.mrf.mxu0
  %v597 = vadd.f32 0.0, %v596
  %598 = vmatmul.f32.gmra.mxu0 %v542
  %v599 = vpop.f32.mrf.mxu0
  %v600 = vadd.f32 0.0, %v599
  %601 = vdwg.mxu0
  %602 = vmatpush.msra.mxu0 %v97
  %603 = vmatpush.msra.mxu0 %v96
  %604 = vmatpush.msra.mxu0 %v95
  %605 = vmatpush.msra.mxu0 %v94
  %606 = vmatpush.msra.mxu0 %v93
  %607 = vmatpush.msra.mxu0 %v92
  %608 = vmatpush.msra.mxu0 %v91
  %609 = vmatpush.msra.mxu0 %v90
  %610 = vmatpush.msra.mxu0 %v89
  %611 = vmatpush.msra.mxu0 %v88
  %612 = vmatpush.msra.mxu0 %v87
  %613 = vmatpush.msra.mxu0 %v86
  %614 = vmatpush.msra.mxu0 %v85
  %615 = vmatpush.msra.mxu0 %v84
  %616 = vmatpush.msra.mxu0 %v83
  %617 = vmatpush.msra.mxu0 %v82
  %618 = vmatmul.f32.gmra.mxu0 %v511
  %v619 = vpop.f32.mrf.mxu0
  %v620 = vadd.f32 %v591, %v619
  %621 = vmatmul.f32.gmra.mxu0 %v512
  %v622 = vpop.f32.mrf.mxu0
  %v623 = vadd.f32 %v594, %v622
  %624 = vmatmul.f32.gmra.mxu0 %v513
  %v625 = vpop.f32.mrf.mxu0
  %v626 = vadd.f32 %v597, %v625
  %627 = vmatmul.f32.gmra.mxu0 %v514
  %v628 = vpop.f32.mrf.mxu0
  %v629 = vadd.f32 %v600, %v628
  %630 = vdwg.mxu0
  %631 = vmatpush.msra.mxu0 %v113
  %632 = vmatpush.msra.mxu0 %v112
  %633 = vmatpush.msra.mxu0 %v111
  %634 = vmatpush.msra.mxu0 %v110
  %635 = vmatpush.msra.mxu0 %v109
  %636 = vmatpush.msra.mxu0 %v108
  %637 = vmatpush.msra.mxu0 %v107
  %638 = vmatpush.msra.mxu0 %v106
  %639 = vmatpush.msra.mxu0 %v105
  %640 = vmatpush.msra.mxu0 %v104
  %641 = vmatpush.msra.mxu0 %v103
  %642 = vmatpush.msra.mxu0 %v102
  %643 = vmatpush.msra.mxu0 %v101
  %644 = vmatpush.msra.mxu0 %v100
  %645 = vmatpush.msra.mxu0 %v99
  %646 = vmatpush.msra.mxu0 %v98
  %647 = vmatmul.f32.gmra.mxu0 %v562
  %v648 = vpop.f32.mrf.mxu0
  %v649 = vadd.f32 0.0, %v648
  %650 = vmatmul.f32.gmra.mxu0 %v565
  %v651 = vpop.f32.mrf.mxu0
  %v652 = vadd.f32 0.0, %v651
  %653 = vmatmul.f32.gmra.mxu0 %v568
  %v654 = vpop.f32.mrf.mxu0
  %v655 = vadd.f32 0.0, %v654
  %656 = vmatmul.f32.gmra.mxu0 %v571
  %v657 = vpop.f32.mrf.mxu0
  %v658 = vadd.f32 0.0, %v657
  %659 = vdwg.mxu0
  %v660 = vadd.f32 %v620, %v649
  %v661 = vadd.f32 %v623, %v652
  %v662 = vadd.f32 %v626, %v655
  %v663 = vadd.f32 %v629, %v658
  %v664 = vadd.f32 %v660, %v661
  %v665 = vadd.f32 %v664, %v662
  %v666 = vadd.f32 %v665, %v663
  %v667 = vrot.slane %v666, 4
  %v668 = vadd.f32 %v666, %v667
  %v669 = vrot.slane %v668, 2
  %v670 = vadd.f32 %v668, %v669
  %v671 = vrot.slane %v670, 1
  %v672 = vadd.f32 %v670, %v671
  %v673 = vmul.f32 %v660, %v660
  %v674 = vmul.f32 %v661, %v661
  %v675 = vmul.f32 %v662, %v662
  %v676 = vmul.f32 %v663, %v663
  %v677 = vadd.f32 %v673, %v674
  %v678 = vadd.f32 %v677, %v675
  %v679 = vadd.f32 %v678, %v676
  %v680 = vrot.slane %v679, 4
  %v681 = vadd.f32 %v679, %v680
  %v682 = vrot.slane %v681, 2
  %v683 = vadd.f32 %v681, %v682
  %v684 = vrot.slane %v683, 1
  %v685 = vadd.f32 %v683, %v684
  %686 = vmatpush.msra.mxu0 %v191
  %687 = vmatpush.msra.mxu0 %v190
  %688 = vmatpush.msra.mxu0 %v189
  %689 = vmatpush.msra.mxu0 %v188
  %690 = vmatpush.msra.mxu0 %v187
  %691 = vmatpush.msra.mxu0 %v186
  %692 = vmatpush.msra.mxu0 %v185
  %693 = vmatpush.msra.mxu0 %v184
  %694 = vmatpush.msra.mxu0 %v183
  %695 = vmatpush.msra.mxu0 %v182
  %696 = vmatpush.msra.mxu0 %v181
  %697 = vmatpush.msra.mxu0 %v180
  %698 = vmatpush.msra.mxu0 %v179
  %699 = vmatpush.msra.mxu0 %v178
  %700 = vmatpush.msra.mxu0 %v177
  %701 = vmatpush.msra.mxu0 %v176
  %702 = vmatmul.f32.gmra.mxu0 %v672
  %v703 = vpop.f32.mrf.mxu0
  %v704 = vadd.f32 0.0, %v703
  %705 = vdwg.mxu0
  %v706 = vmul.f32 %v704, 0.001953125
  %707 = vmatpush.msra.mxu0 %v191
  %708 = vmatpush.msra.mxu0 %v190
  %709 = vmatpush.msra.mxu0 %v189
  %710 = vmatpush.msra.mxu0 %v188
  %711 = vmatpush.msra.mxu0 %v187
  %712 = vmatpush.msra.mxu0 %v186
  %713 = vmatpush.msra.mxu0 %v185
  %714 = vmatpush.msra.mxu0 %v184
  %715 = vmatpush.msra.mxu0 %v183
  %716 = vmatpush.msra.mxu0 %v182
  %717 = vmatpush.msra.mxu0 %v181
  %718 = vmatpush.msra.mxu0 %v180
  %719 = vmatpush.msra.mxu0 %v179
  %720 = vmatpush.msra.mxu0 %v178
  %721 = vmatpush.msra.mxu0 %v177
  %722 = vmatpush.msra.mxu0 %v176
  %723 = vmatmul.f32.gmra.mxu0 %v685
  %v724 = vpop.f32.mrf.mxu0
  %v725 = vadd.f32 0.0, %v724
  %726 = vdwg.mxu0
  %v727 = vmul.f32 %v725, 0.001953125
  %v728 = vmul.f32 %v706, %v706
  %v729 = vsub.f32 %v727, %v728
  %v730 = vmax.f32 %v729, 0.0
  %v731 = vadd.f32 %v730, 1e-05
  %v732 = vrsqrt.pop %v731
  %v733 = vmul.f32 %v732, %v731
  %v734 = vmul.f32 %v733, %v732
  %v735 = vmul.f32 0.5, %v734
  %v736 = vsub.f32 1.5, %v735
  %v737 = vmul.f32 %v732, %v736
  %vm738 = vweird.f32 %v731
  %vm739 = vweird.f32 %v732
  %vm740 = vmor %vm738, %vm739
  %v741 = vsel %vm740, %v732, %v737
  %v743 = vrot.slane %v741, 6
  %v745 = vmul.f32 %v200, %v743
  %v747 = vrot.slane %v745, 2
  %v749 = vmul.f32 %v706, %v747
  %v751 = vrot.slane %v749, 5
  %v753 = vsub.f32 %v200, %v751
  %v754 = vperm.slane %v745, 2
  %v755 = vmul.f32 %v660, %v754
  %v756 = vmul.f32 %v661, %v754
  %v757 = vmul.f32 %v662, %v754
  %v758 = vmul.f32 %v663, %v754
  %v759 = vperm.slane %v753, 3
  %v760 = vadd.f32 %v755, %v759
  %v761 = vadd.f32 %v756, %v759
  %v762 = vadd.f32 %v757, %v759
  %v763 = vadd.f32 %v758, %v759
  %764 = vmatpush.msra.mxu0 %v137
  %765 = vmatpush.msra.mxu0 %v136
  %766 = vmatpush.msra.mxu0 %v135
  %767 = vmatpush.msra.mxu0 %v134
  %768 = vmatpush.msra.mxu0 %v133
  %769 = vmatpush.msra.mxu0 %v132
  %770 = vmatpush.msra.mxu0 %v131
  %771 = vmatpush.msra.mxu0 %v130
  %772 = vmatpush.msra.mxu0 %v129
  %773 = vmatpush.msra.mxu0 %v128
  %774 = vmatpush.msra.mxu0 %v127
  %775 = vmatpush.msra.mxu0 %v126
  %776 = vmatpush.msra.mxu0 %v125
  %777 = vmatpush.msra.mxu0 %v124
  %778 = vmatpush.msra.mxu0 %v123
  %779 = vmatpush.msra.mxu0 %v122
  %780 = vmatmul.f32.gmra.mxu0 %v760
  %v781 = vpop.f32.mrf.mxu0
  %v782 = vadd.f32 0.0, %v781
  %783 = vmatmul.f32.gmra.mxu0 %v761
  %v784 = vpop.f32.mrf.mxu0
  %v785 = vadd.f32 0.0, %v784
  %786 = vmatmul.f32.gmra.mxu0 %v762
  %v787 = vpop.f32.mrf.mxu0
  %v788 = vadd.f32 0.0, %v787
  %789 = vmatmul.f32.gmra.mxu0 %v763
  %v790 = vpop.f32.mrf.mxu0
  %v791 = vadd.f32 0.0, %v790
  %792 = vdwg.mxu0
  %793 = vmatpush.msra.mxu0 %v153
  %794 = vmatpush.msra.mxu0 %v152
  %795 = vmatpush.msra.mxu0 %v151
  %796 = vmatpush.msra.mxu0 %v150
  %797 = vmatpush.msra.mxu0 %v149
  %798 = vmatpush.msra.mxu0 %v148
  %799 = vmatpush.msra.mxu0 %v147
  %800 = vmatpush.msra.mxu0 %v146
  %801 = vmatpush.msra.mxu0 %v145
  %802 = vmatpush.msra.mxu0 %v144
  %803 = vmatpush.msra.mxu0 %v143
  %804 = vmatpush.msra.mxu0 %v142
  %805 = vmatpush.msra.mxu0 %v141
  %806 = vmatpush.msra.mxu0 %v140
  %807 = vmatpush.msra.mxu0 %v139
  %808 = vmatpush.msra.mxu0 %v138
  %809 = vmatmul.f32.gmra.mxu0 %v760
  %v810 = vpop.f32.mrf.mxu0
  %v811 = vadd.f32 0.0, %v810
  %812 = vmatmul.f32.gmra.mxu0 %v761
  %v813 = vpop.f32.mrf.mxu0
  %v814 = vadd.f32 0.0, %v813
  %815 = vmatmul.f32.gmra.mxu0 %v762
  %v816 = vpop.f32.mrf.mxu0
  %v817 = vadd.f32 0.0, %v816
  %818 = vmatmul.f32.gmra.mxu0 %v763
  %v819 = vpop.f32.mrf.mxu0
  %v820 = vadd.f32 0.0, %v819
  %821 = vdwg.mxu0
  %v822 = vmax.f32 %v782, %v811
  %v823 = vmax.f32 %v785, %v814
  %v824 = vmax.f32 %v788, %v817
  %v825 = vmax.f32 %v791, %v820
  %826 = vmatpush.msra.mxu0 %v169
  %827 = vmatpush.msra.mxu0 %v168
  %828 = vmatpush.msra.mxu0 %v167
  %829 = vmatpush.msra.mxu0 %v166
  %830 = vmatpush.msra.mxu0 %v165
  %831 = vmatpush.msra.mxu0 %v164
  %832 = vmatpush.msra.mxu0 %v163
  %833 = vmatpush.msra.mxu0 %v162
  %834 = vmatpush.msra.mxu0 %v161
  %835 = vmatpush.msra.mxu0 %v160
  %836 = vmatpush.msra.mxu0 %v159
  %837 = vmatpush.msra.mxu0 %v158
  %838 = vmatpush.msra.mxu0 %v157
  %839 = vmatpush.msra.mxu0 %v156
  %840 = vmatpush.msra.mxu0 %v155
  %841 = vmatpush.msra.mxu0 %v154
  %842 = vmatmul.f32.gmra.mxu0 %v760
  %v843 = vpop.f32.mrf.mxu0
  %v844 = vadd.f32 0.0, %v843
  %845 = vmatmul.f32.gmra.mxu0 %v761
  %v846 = vpop.f32.mrf.mxu0
  %v847 = vadd.f32 0.0, %v846
  %848 = vmatmul.f32.gmra.mxu0 %v762
  %v849 = vpop.f32.mrf.mxu0
  %v850 = vadd.f32 0.0, %v849
  %851 = vmatmul.f32.gmra.mxu0 %v763
  %v852 = vpop.f32.mrf.mxu0
  %v853 = vadd.f32 0.0, %v852
  %854 = vdwg.mxu0
  %v855 = vmax.f32 %v822, %v844
  %v856 = vmax.f32 %v823, %v847
  %v857 = vmax.f32 %v824, %v850
  %v858 = vmax.f32 %v825, %v853
  %v860 = vsel %vm206, %v170, 0
  %v863 = vsel %vm206, %v171, 0
  %865 = vmatpush.msra.mxu0 0.0
  %866 = vmatpush.msra.mxu0 0.0
  %867 = vmatpush.msra.mxu0 0.0
  %868 = vmatpush.msra.mxu0 0.0
  %869 = vmatpush.msra.mxu0 0.0
  %870 = vmatpush.msra.mxu0 0.0
  %871 = vmatpush.msra.mxu0 0.0
  %872 = vmatpush.msra.mxu0 0.0
  %873 = vmatpush.msra.mxu0 0.0
  %874 = vmatpush.msra.mxu0 0.0
  %875 = vmatpush.msra.mxu0 0.0
  %876 = vmatpush.msra.mxu0 0.0
  %877 = vmatpush.msra.mxu0 %v858
  %878 = vmatpush.msra.mxu0 %v857
  %879 = vmatpush.msra.mxu0 %v856
  %880 = vmatpush.msra.mxu0 %v855
  %881 = vmatmul.f32.gmra.mxu0 %v860
  %v882 = vpop.f32.mrf.mxu0
  %v883 = vadd.f32 0.0, %v882
  %884 = vmatmul.f32.gmra.mxu0 %v863
  %v885 = vpop.f32.mrf.mxu0
  %v886 = vadd.f32 0.0, %v885
  %887 = vdwg.mxu0
  %v889 = vsel %vm206, %v172, 0
  %v892 = vsel %vm206, %v173, 0
  %894 = vmatpush.msra.mxu0 0.0
  %895 = vmatpush.msra.mxu0 0.0
  %896 = vmatpush.msra.mxu0 0.0
  %897 = vmatpush.msra.mxu0 0.0
  %898 = vmatpush.msra.mxu0 0.0
  %899 = vmatpush.msra.mxu0 0.0
  %900 = vmatpush.msra.mxu0 0.0
  %901 = vmatpush.msra.mxu0 0.0
  %902 = vmatpush.msra.mxu0 0.0
  %903 = vmatpush.msra.mxu0 0.0
  %904 = vmatpush.msra.mxu0 0.0
  %905 = vmatpush.msra.mxu0 0.0
  %906 = vmatpush.msra.mxu0 %v858
  %907 = vmatpush.msra.mxu0 %v857
  %908 = vmatpush.msra.mxu0 %v856
  %909 = vmatpush.msra.mxu0 %v855
  %910 = vmatmul.f32.gmra.mxu0 %v889
  %v911 = vpop.f32.mrf.mxu0
  %v912 = vadd.f32 0.0, %v911
  %913 = vmatmul.f32.gmra.mxu0 %v892
  %v914 = vpop.f32.mrf.mxu0
  %v915 = vadd.f32 0.0, %v914
  %916 = vdwg.mxu0
  %v917 = vmax.f32 %v883, %v912
  %v918 = vmax.f32 %v886, %v915
  %v920 = vsel %vm206, %v174, 0
  %v923 = vsel %vm206, %v175, 0
  %925 = vmatpush.msra.mxu0 0.0
  %926 = vmatpush.msra.mxu0 0.0
  %927 = vmatpush.msra.mxu0 0.0
  %928 = vmatpush.msra.mxu0 0.0
  %929 = vmatpush.msra.mxu0 0.0
  %930 = vmatpush.msra.mxu0 0.0
  %931 = vmatpush.msra.mxu0 0.0
  %932 = vmatpush.msra.mxu0 0.0
  %933 = vmatpush.msra.mxu0 0.0
  %934 = vmatpush.msra.mxu0 0.0
  %935 = vmatpush.msra.mxu0 0.0
  %936 = vmatpush.msra.mxu0 0.0
  %937 = vmatpush.msra.mxu0 %v858
  %938 = vmatpush.msra.mxu0 %v857
  %939 = vmatpush.msra.mxu0 %v856
  %940 = vmatpush.msra.mxu0 %v855
  %941 = vmatmul.f32.gmra.mxu0 %v920
  %v942 = vpop.f32.mrf.mxu0
  %v943 = vadd.f32 0.0, %v942
  %944 = vmatmul.f32.gmra.mxu0 %v923
  %v945 = vpop.f32.mrf.mxu0
  %v946 = vadd.f32 0.0, %v945
  %947 = vdwg.mxu0
  %v948 = vmax.f32 %v917, %v943
  %v949 = vmax.f32 %v918, %v946
  %950 = vmatpush.msra.mxu0 0.0
  %951 = vmatpush.msra.mxu0 0.0
  %952 = vmatpush.msra.mxu0 0.0
  %953 = vmatpush.msra.mxu0 0.0
  %954 = vmatpush.msra.mxu0 0.0
  %955 = vmatpush.msra.mxu0 0.0
  %956 = vmatpush.msra.mxu0 0.0
  %957 = vmatpush.msra.mxu0 0.0
  %958 = vmatpush.msra.mxu0 0.0
  %959 = vmatpush.msra.mxu0 0.0
  %960 = vmatpush.msra.mxu0 0.0
  %961 = vmatpush.msra.mxu0 0.0
  %962 = vmatpush.msra.mxu0 %v41
  %963 = vmatpush.msra.mxu0 %v40
  %964 = vmatpush.msra.mxu0 %v39
  %965 = vmatpush.msra.mxu0 %v38
  %966 = vmatmul.f32.gmra.mxu0 %v889
  %v967 = vpop.f32.mrf.mxu0
  %v968 = vadd.f32 0.0, %v967
  %969 = vmatmul.f32.gmra.mxu0 %v892
  %v970 = vpop.f32.mrf.mxu0
  %v971 = vadd.f32 0.0, %v970
  %972 = vdwg.mxu0
  %v973 = vld [vmem:[%s3] sm:$0xff]
  %v974 = vld [vmem:[%s3 + $0x8] sm:$0xff]
  %v975 = vld [vmem:[%s3 + $0x10] sm:$0xff]
  %v976 = vld [vmem:[%s3 + $0x18] sm:$0xff]
  %v977 = vld [vmem:[%s3 + $0x20] sm:$0xff]
  %v978 = vld [vmem:[%s3 + $0x28] sm:$0xff]
  %v979 = vld [vmem:[%s3 + $0x30] sm:$0xff]
  %v980 = vld [vmem:[%s3 + $0x38] sm:$0xff]
  %v982 = vsel %vm289, %v968, 0
  %v985 = vsel %vm289, %v971, 0
  %987 = vmatpush.msra.mxu0 0.0
  %988 = vmatpush.msra.mxu0 0.0
  %989 = vmatpush.msra.mxu0 0.0
  %990 = vmatpush.msra.mxu0 0.0
  %991 = vmatpush.msra.mxu0 0.0
  %992 = vmatpush.msra.mxu0 0.0
  %993 = vmatpush.msra.mxu0 0.0
  %994 = vmatpush.msra.mxu0 0.0
  %995 = vmatpush.msra.mxu0 %v980
  %996 = vmatpush.msra.mxu0 %v979
  %997 = vmatpush.msra.mxu0 %v978
  %998 = vmatpush.msra.mxu0 %v977
  %999 = vmatpush.msra.mxu0 %v976
  %1000 = vmatpush.msra.mxu0 %v975
  %1001 = vmatpush.msra.mxu0 %v974
  %1002 = vmatpush.msra.mxu0 %v973
  %1003 = vmatmul.f32.gmra.mxu0 %v982
  %v1004 = vpop.f32.mrf.mxu0
  %v1005 = vadd.f32 0.0, %v1004
  %1006 = vmatmul.f32.gmra.mxu0 %v985
  %v1007 = vpop.f32.mrf.mxu0
  %v1008 = vadd.f32 0.0, %v1007
  %1009 = vdwg.mxu0
  %v1010 = vsel %vm289, %v1005, 0.0
  %v1011 = vsel %vm289, %v1008, 0.0
  %v1012 = vadd.f32 %v1010, %v1011
  %v1013 = vrot.slane %v1012, 4
  %v1014 = vadd.f32 %v1012, %v1013
  %v1015 = vrot.slane %v1014, 2
  %v1016 = vadd.f32 %v1014, %v1015
  %v1017 = vrot.slane %v1016, 1
  %v1018 = vadd.f32 %v1016, %v1017
  %v1019 = vmul.f32 %v1005, %v1005
  %v1020 = vmul.f32 %v1008, %v1008
  %v1021 = vsel %vm289, %v1019, 0.0
  %v1022 = vsel %vm289, %v1020, 0.0
  %v1023 = vadd.f32 %v1021, %v1022
  %v1024 = vrot.slane %v1023, 4
  %v1025 = vadd.f32 %v1023, %v1024
  %v1026 = vrot.slane %v1025, 2
  %v1027 = vadd.f32 %v1025, %v1026
  %v1028 = vrot.slane %v1027, 1
  %v1029 = vadd.f32 %v1027, %v1028
  %v1031 = vsel %vm289, %v1018, 0
  %1033 = vmatpush.msra.mxu0 0.0
  %1034 = vmatpush.msra.mxu0 0.0
  %1035 = vmatpush.msra.mxu0 0.0
  %1036 = vmatpush.msra.mxu0 0.0
  %1037 = vmatpush.msra.mxu0 0.0
  %1038 = vmatpush.msra.mxu0 0.0
  %1039 = vmatpush.msra.mxu0 0.0
  %1040 = vmatpush.msra.mxu0 0.0
  %1041 = vmatpush.msra.mxu0 %v199
  %1042 = vmatpush.msra.mxu0 %v198
  %1043 = vmatpush.msra.mxu0 %v197
  %1044 = vmatpush.msra.mxu0 %v196
  %1045 = vmatpush.msra.mxu0 %v195
  %1046 = vmatpush.msra.mxu0 %v194
  %1047 = vmatpush.msra.mxu0 %v193
  %1048 = vmatpush.msra.mxu0 %v192
  %1049 = vmatmul.f32.gmra.mxu0 %v1031
  %v1050 = vpop.f32.mrf.mxu0
  %v1051 = vadd.f32 0.0, %v1050
  %1052 = vdwg.mxu0
  %v1053 = vmul.f32 %v1051, 0.0078125
  %v1055 = vsel %vm289, %v1029, 0
  %1057 = vmatpush.msra.mxu0 0.0
  %1058 = vmatpush.msra.mxu0 0.0
  %1059 = vmatpush.msra.mxu0 0.0
  %1060 = vmatpush.msra.mxu0 0.0
  %1061 = vmatpush.msra.mxu0 0.0
  %1062 = vmatpush.msra.mxu0 0.0
  %1063 = vmatpush.msra.mxu0 0.0
  %1064 = vmatpush.msra.mxu0 0.0
  %1065 = vmatpush.msra.mxu0 %v199
  %1066 = vmatpush.msra.mxu0 %v198
  %1067 = vmatpush.msra.mxu0 %v197
  %1068 = vmatpush.msra.mxu0 %v196
  %1069 = vmatpush.msra.mxu0 %v195
  %1070 = vmatpush.msra.mxu0 %v194
  %1071 = vmatpush.msra.mxu0 %v193
  %1072 = vmatpush.msra.mxu0 %v192
  %1073 = vmatmul.f32.gmra.mxu0 %v1055
  %v1074 = vpop.f32.mrf.mxu0
  %v1075 = vadd.f32 0.0, %v1074
  %1076 = vdwg.mxu0
  %v1077 = vmul.f32 %v1075, 0.0078125
  %v1078 = vmul.f32 %v1053, %v1053
  %v1079 = vsub.f32 %v1077, %v1078
  %v1080 = vmax.f32 %v1079, 0.0
  %v1081 = vadd.f32 %v1080, 1e-05
  %v1082 = vrsqrt.pop %v1081
  %v1083 = vmul.f32 %v1082, %v1081
  %v1084 = vmul.f32 %v1083, %v1082
  %v1085 = vmul.f32 0.5, %v1084
  %v1086 = vsub.f32 1.5, %v1085
  %v1087 = vmul.f32 %v1082, %v1086
  %vm1088 = vweird.f32 %v1081
  %vm1089 = vweird.f32 %v1082
  %vm1090 = vmor %vm1088, %vm1089
  %v1091 = vsel %vm1090, %v1082, %v1087
  %v1092 = vmul.f32 %v201, %v1091
  %v1093 = vmul.f32 %v1053, %v1092
  %v1095 = vrot.slane %v1093, 7
  %v1097 = vsub.f32 %v201, %v1095
  %v1098 = vperm.slane %v1092, 0
  %v1099 = vmul.f32 %v1005, %v1098
  %v1100 = vmul.f32 %v1008, %v1098
  %v1101 = vperm.slane %v1097, 1
  %v1102 = vadd.f32 %v1099, %v1101
  %v1103 = vadd.f32 %v1100, %v1101
  %v1104 = vadd.f32 %v948, %v1102
  %v1105 = vadd.f32 %v949, %v1103
  %1106 = vst.msk [vmem:[%s11] sm:$0xff] %vm289, %v1104
  %1107 = vst.msk [vmem:[%s11 + $0x8] sm:$0xff] %vm289, %v1105
  // Predicated region
  $region46: #{block_forward.1} parent=0 // pred_check
    _
  $region47: #{block_forward.1} parent=0 // pred_check_branch
    %1109 = sbr.rel (0) target = $region49
  $region48: #{block_forward.1} parent=0 // pred_region
    _
  $region49: #{block_forward.1} parent=0 // pred_fallthru
    _
  // Predicated region
  $region50: #{block_forward.1} parent=0 // pred_check
    _
  $region51: #{block_forward.1} parent=0 // pred_check_branch
    %1111 = sbr.rel (0) target = $region53
  $region52: #{block_forward.1} parent=0 // pred_region
    _
  $region53: #{block_forward.1} parent=0 // pred_fallthru
    _

</llo_original>
